<compile_context>
chip_gen: v7x
topology: tpu7x:2x2x1
jax: 0.10.0
libtpu: 0.0.40
codegen_flags: <defaults>
</compile_context>

<pallas_src>
import functools

import jax
import jax.numpy as jnp
from jax import lax
from jax.experimental import pallas as pl
from jax.experimental.pallas import tpu as pltpu

N_EMBED = 384          # fixed by the module
BLOCK_SIZE = 256       # max sequence length (tril buffer size)
HEAD_PAD = 128         # lane-aligned padded head width


def _attn_head_kernel(x_ref, w_ref, o_ref, *, q_block, seq_len):
    # x_ref: (T, C) bf16
    # w_ref: (C, 3*128) bf16 = [Wq*scale | Wk | Wv], each zero-padded to 128 cols
    # o_ref: (TQ, 128) f32 (lane-dense; padded cols are zero, sliced off outside)
    TQ = q_block
    T = seq_len
    HP = HEAD_PAD
    qi = pl.program_id(1)

    x = x_ref[...]                                              # (T, C) bf16
    w = w_ref[...]                                              # (C, 3*HP) bf16

    # K/V projection over the full sequence.  Column slices of w are on
    # 128-lane boundaries -> pure views.
    kv = jnp.dot(x, w[:, HP:], preferred_element_type=jnp.float32)   # (T, 2*HP)
    k = kv[:, :HP].astype(jnp.bfloat16)                         # (T, HP)
    v = kv[:, HP:].astype(jnp.bfloat16)                         # (T, HP)

    # Q projection for this query block only (scale already folded into Wq).
    q_start = pl.multiple_of(qi * TQ, TQ)
    x_q = x_ref[pl.ds(q_start, TQ), :]                          # (TQ, C) bf16
    q = jnp.dot(x_q, w[:, :HP],
                preferred_element_type=jnp.float32).astype(jnp.bfloat16)

    # q @ k^T contracting the last dim of both operands (no explicit k^T).
    # Padded (zero) columns of q/k contribute nothing to the contraction.
    scores = lax.dot_general(
        q, k, dimension_numbers=(((1,), (1,)), ((), ())),
        preferred_element_type=jnp.float32)                     # (TQ, T) f32

    # Causal mask: global query row = qi*TQ + local row.  Every row keeps its
    # diagonal, so the -inf path cannot produce a fully-masked (NaN) row.
    row = lax.broadcasted_iota(jnp.int32, (TQ, T), 0)
    col = lax.broadcasted_iota(jnp.int32, (TQ, T), 1)
    scores = jnp.where(col - row <= qi * TQ, scores, -jnp.inf)

    # Softmax in f32 (generation-safe); approx reciprocal goes to the EUP slot.
    scores = scores - jnp.max(scores, axis=-1, keepdims=True)
    p = jnp.exp(scores)
    p = p * pl.reciprocal(jnp.sum(p, axis=-1, keepdims=True), approx=True)

    # TODO(synk): dropout on attention weights omitted (eval-mode semantics).
    o_ref[...] = jnp.dot(p.astype(jnp.bfloat16), v,
                         preferred_element_type=jnp.float32).astype(o_ref.dtype)


def self_attention_head(x, w_key, w_query, w_value, head_size):
    """x: (B, T, C) float32, w_*: (C, head_size). Returns (B, T, head_size)."""
    B, T, C = x.shape
    assert C == N_EMBED and T <= BLOCK_SIZE
    HP = HEAD_PAD
    assert head_size <= HP

    scale = head_size ** -0.5

    def pad(w):
        return jnp.pad(w, ((0, 0), (0, HP - head_size)))

    # Parameter prep: done once here (constant-folded / hoisted under jit when
    # the weights are parameters).  Lane-align each head slice to a 128-column
    # boundary, fold the 1/sqrt(H) scale into Wq, and cast everything to bf16
    # so the kernel DMAs half the bytes and never casts a full (T, C) tile.
    w_qkv = jnp.concatenate([pad(w_query * scale), pad(w_key), pad(w_value)],
                            axis=1).astype(jnp.bfloat16)         # (C, 3*HP)
    x_bf16 = x.astype(jnp.bfloat16)

    TQ = 128 if (T % 128 == 0) else T
    n_qb = T // TQ

    kernel = functools.partial(_attn_head_kernel, q_block=TQ, seq_len=T)

    cost = pl.CostEstimate(
        flops=B * (2 * T * C * 3 * HP + 2 * 2 * T * T * HP),
        transcendentals=B * T * T,
        bytes_accessed=B * T * C * 2 + C * 3 * HP * 2 + B * T * HP * 4)

    out_padded = pl.pallas_call(
        kernel,
        out_shape=jax.ShapeDtypeStruct((B, T, HP), x.dtype),
        grid_spec=pltpu.PrefetchScalarGridSpec(
            num_scalar_prefetch=0,
            grid=(B, n_qb),
            in_specs=[
                # Squeezed batch dim: kernel sees clean 2-D (T, C) / (C, 3HP).
                # x's block index is constant across qi -> fetched once per b.
                pl.BlockSpec((pl.Squeezed(), T, C), lambda b, qi: (b, 0, 0)),
                pl.BlockSpec((C, 3 * HP), lambda b, qi: (0, 0)),
            ],
            out_specs=pl.BlockSpec((pl.Squeezed(), TQ, HP),
                                   lambda b, qi: (b, qi, 0)),
        ),
        compiler_params=pltpu.CompilerParams(
            dimension_semantics=("parallel", "parallel")),
        cost_estimate=cost,
    )(x_bf16, w_qkv)

    # Drop the zero padding columns (kernel-side store stays lane-dense).
    return out_padded[..., :head_size]


def _reference(x, w_key, w_query, w_value, head_size):
    k = x @ w_key
    q = x @ w_query
    v = x @ w_value
    wei = (q @ jnp.swapaxes(k, -2, -1)) * head_size ** (-0.5)
    T = x.shape[1]
    mask = jnp.tril(jnp.ones((T, T), dtype=bool))
    wei = jnp.where(mask, wei, -jnp.inf)
    wei = jax.nn.softmax(wei, axis=-1)
    return wei @ v


if __name__ == "__main__":
    B, T, C = 2, 128, N_EMBED
    head_size = 64

    key = jax.random.PRNGKey(0)
    kx, kk, kq, kv = jax.random.split(key, 4)
    x = jax.random.normal(kx, (B, T, C), dtype=jnp.float32)
    # nn.Linear-style init: uniform(-1/sqrt(fan_in), 1/sqrt(fan_in))
    bound = 1.0 / (C ** 0.5)
    w_key = jax.random.uniform(kk, (C, head_size), jnp.float32, -bound, bound)
    w_query = jax.random.uniform(kq, (C, head_size), jnp.float32, -bound, bound)
    w_value = jax.random.uniform(kv, (C, head_size), jnp.float32, -bound, bound)

    out = self_attention_head(x, w_key, w_query, w_value, head_size)
    out = jax.block_until_ready(out)

    ref = _reference(x, w_key, w_query, w_value, head_size)
    assert out.shape == (B, T, head_size)
    # bf16 matmul operands with f32 accumulation: loosened tolerance.
    assert jnp.allclose(out, ref, atol=2e-2, rtol=2e-2), "mismatch vs reference"
    print("KERNEL_OK")
</pallas_src>

<mosaic_0001>
module attributes {stable_mosaic.version = 11 : i64} {
  func.func @_attn_head_kernel(%arg0: i32, %arg1: i32, %arg2: memref<1x128x384xbf16, #tpu.memory_space<vmem>>, %arg3: memref<384x384xbf16, #tpu.memory_space<vmem>>, %arg4: memref<1x128x128xf32, #tpu.memory_space<vmem>>) attributes {dimension_semantics = [#tpu.dimension_semantics<parallel>, #tpu.dimension_semantics<parallel>], iteration_bounds = array<i64: 2, 1>, scalar_prefetch = 0 : i64, scratch_operands = 0 : i64, tpu.core_type = #tpu.core_type<tc>, window_params = [{transform_indices = @transform_0, window_bounds = array<i64: 1, 128, 384>}, {pipeline_mode = #tpu.pipeline_mode<synchronous>, transform_indices = @transform_1, window_bounds = array<i64: 384, 384>}, {transform_indices = @transform_2, window_bounds = array<i64: 1, 128, 128>}]} {
    %c0 = arith.constant 0 : index
    %c0_0 = arith.constant 0 : index
    %c0_1 = arith.constant 0 : index
    %0 = vector.load %arg2[%c0, %c0_0, %c0_1] : memref<1x128x384xbf16, #tpu.memory_space<vmem>>, vector<1x128x384xbf16>
    %1 = vector.shape_cast %0 : vector<1x128x384xbf16> to vector<128x384xbf16>
    %c0_2 = arith.constant 0 : index
    %c0_3 = arith.constant 0 : index
    %2 = vector.load %arg3[%c0_2, %c0_3] : memref<384x384xbf16, #tpu.memory_space<vmem>>, vector<384x384xbf16>
    %3 = vector.extract_strided_slice %2 {offsets = [0, 128], sizes = [384, 256], strides = [1, 1]} : vector<384x384xbf16> to vector<384x256xbf16>
    %cst = arith.constant dense<0.000000e+00> : vector<128x256xf32>
    %4 = tpu.matmul %1, %3, %cst {dimension_numbers = #tpu.dot_dimension_numbers<[1], [0], [0], [1], [0, 0, 1, 1], [], []>} : vector<128x384xbf16>, vector<384x256xbf16>, vector<128x256xf32> -> vector<128x256xf32>
    %5 = vector.extract_strided_slice %4 {offsets = [0, 0], sizes = [128, 128], strides = [1, 1]} : vector<128x256xf32> to vector<128x128xf32>
    %6 = arith.truncf %5 : vector<128x128xf32> to vector<128x128xbf16>
    %7 = vector.extract_strided_slice %4 {offsets = [0, 128], sizes = [128, 128], strides = [1, 1]} : vector<128x256xf32> to vector<128x128xf32>
    %8 = arith.truncf %7 : vector<128x128xf32> to vector<128x128xbf16>
    %c128_i32 = arith.constant 128 : i32
    %9 = arith.muli %arg1, %c128_i32 : i32
    %10 = tpu.assume_multiple %9, 128 : i32
    %c0_4 = arith.constant 0 : index
    %11 = arith.index_cast %10 : i32 to index
    %c0_5 = arith.constant 0 : index
    %12 = vector.load %arg2[%c0_4, %11, %c0_5] : memref<1x128x384xbf16, #tpu.memory_space<vmem>>, vector<1x128x384xbf16>
    %13 = vector.shape_cast %12 : vector<1x128x384xbf16> to vector<128x384xbf16>
    %14 = vector.extract_strided_slice %2 {offsets = [0, 0], sizes = [384, 128], strides = [1, 1]} : vector<384x384xbf16> to vector<384x128xbf16>
    %cst_6 = arith.constant dense<0.000000e+00> : vector<128x128xf32>
    %15 = tpu.matmul %13, %14, %cst_6 {dimension_numbers = #tpu.dot_dimension_numbers<[1], [0], [0], [1], [0, 0, 1, 1], [], []>} : vector<128x384xbf16>, vector<384x128xbf16>, vector<128x128xf32> -> vector<128x128xf32>
    %16 = arith.truncf %15 : vector<128x128xf32> to vector<128x128xbf16>
    %cst_7 = arith.constant dense<0.000000e+00> : vector<128x128xf32>
    %17 = tpu.matmul %16, %6, %cst_7 {dimension_numbers = #tpu.dot_dimension_numbers<[1], [1], [0], [0], [0, 0, 1, 0], [], []>} : vector<128x128xbf16>, vector<128x128xbf16>, vector<128x128xf32> -> vector<128x128xf32>
    %18 = tpu.iota {dimensions = array<i32: 0>} : vector<128x128xi32>
    %19 = tpu.iota {dimensions = array<i32: 1>} : vector<128x128xi32>
    %20 = arith.subi %19, %18 : vector<128x128xi32>
    %c128_i32_8 = arith.constant 128 : i32
    %21 = arith.muli %arg1, %c128_i32_8 : i32
    %22 = vector.broadcast %21 : i32 to vector<128x128xi32>
    %23 = arith.cmpi sle, %20, %22 : vector<128x128xi32>
    %cst_9 = arith.constant 0xFF800000 : f32
    %24 = vector.broadcast %cst_9 : f32 to vector<128x128xf32>
    %25 = arith.select %23, %17, %24 : vector<128x128xi1>, vector<128x128xf32>
    %cst_10 = arith.constant dense<0xFF800000> : vector<128xf32>
    %26 = vector.multi_reduction <maximumf>, %25, %cst_10 [1] : vector<128x128xf32> to vector<128xf32>
    %27 = vector.shape_cast %26 : vector<128xf32> to vector<128x1xf32>
    %28 = vector.broadcast %27 : vector<128x1xf32> to vector<128x128xf32>
    %29 = arith.subf %25, %28 : vector<128x128xf32>
    %30 = math.exp %29 : vector<128x128xf32>
    %cst_11 = arith.constant dense<0.000000e+00> : vector<128xf32>
    %31 = vector.multi_reduction <add>, %30, %cst_11 [1] : vector<128x128xf32> to vector<128xf32>
    %32 = vector.shape_cast %31 : vector<128xf32> to vector<128x1xf32>
    %33 = tpu.reciprocal %32 {approx = true} : vector<128x1xf32> -> vector<128x1xf32>
    %34 = vector.broadcast %33 : vector<128x1xf32> to vector<128x128xf32>
    %35 = arith.mulf %30, %34 : vector<128x128xf32>
    %36 = arith.truncf %35 : vector<128x128xf32> to vector<128x128xbf16>
    %cst_12 = arith.constant dense<0.000000e+00> : vector<128x128xf32>
    %37 = tpu.matmul %36, %8, %cst_12 {dimension_numbers = #tpu.dot_dimension_numbers<[1], [0], [0], [1], [0, 0, 1, 1], [], []>} : vector<128x128xbf16>, vector<128x128xbf16>, vector<128x128xf32> -> vector<128x128xf32>
    %c0_13 = arith.constant 0 : index
    %c0_14 = arith.constant 0 : index
    %c0_15 = arith.constant 0 : index
    %38 = vector.load %arg4[%c0_13, %c0_14, %c0_15] : memref<1x128x128xf32, #tpu.memory_space<vmem>>, vector<1x128x128xf32>
    %39 = vector.shape_cast %38 : vector<1x128x128xf32> to vector<128x128xf32>
    %40 = vector.shape_cast %37 : vector<128x128xf32> to vector<1x128x128xf32>
    tpu.vector_store %arg4[%c0_13, %c0_14, %c0_15], %40 {strides = array<i32>} : memref<1x128x128xf32, #tpu.memory_space<vmem>>, vector<1x128x128xf32>,
    return
  }
  func.func @transform_0(%arg0: i32, %arg1: i32) -> (i32, i32, i32) {
    %c0_i32 = arith.constant 0 : i32
    %c0_i32_0 = arith.constant 0 : i32
    %c0_i32_1 = arith.constant 0 : i32
    return %arg0, %c0_i32, %c0_i32_0 : i32, i32, i32
  }
  func.func @transform_1(%arg0: i32, %arg1: i32) -> (i32, i32) {
    %c0_i32 = arith.constant 0 : i32
    %c0_i32_0 = arith.constant 0 : i32
    %c0_i32_1 = arith.constant 0 : i32
    return %c0_i32, %c0_i32_0 : i32, i32
  }
  func.func @transform_2(%arg0: i32, %arg1: i32) -> (i32, i32, i32) {
    %c0_i32 = arith.constant 0 : i32
    %c0_i32_0 = arith.constant 0 : i32
    return %arg0, %arg1, %c0_i32 : i32, i32, i32
  }
}

</mosaic_0001>

<llo_original>
// kernel: tpu_custom_call.1
$region0: #{tpu_custom_call.1}
  #allocation0 [shape = 'u32[]', space=smem, size = 0x4, offset = 0x4, fixed_abs, tag = 'smem constant byte address 0x4 - core index']
  #allocation1 [shape = 'u32[144,128]{1,0:T(1,128)}', space=vmem, size = 0x12000, scoped, tag = 'internal scratch']
  %s0 = inlined_call_operand.hbm [shape: bf16[2,128,384], index: 0, kind: input, shape index: {}]
  %s1 = inlined_call_operand.hbm [shape: bf16[384,384], index: 1, kind: input, shape index: {}]
  %s2 = inlined_call_operand.hbm [shape: f32[2,128,128], index: 2, kind: output, shape index: {}]
  %s3 = sld [smem:[#allocation0]]
  $region49: #{tpu_custom_call.1} parent=0
    _
  %s5 = ssub.s32 1, %s3
  %s6 = scalar_select 0, %s5, %s3
  $region1: #{tpu_custom_call.1} parent=0
    #allocation2 [shape = 'u8[196608]{0}', space=vmem, size = 0x30000, scoped, tag = 'input window, operand 0']
    #allocation3 [shape = 's32[2]{0}', space=sflag, size = 0x8, scoped, tag = 'scoped memory for tpu_custom_call.1']
    #allocation4 [shape = 's32[2]{0}', space=sflag, size = 0x8, scoped, tag = 'scoped memory for tpu_custom_call.1']
    #allocation5 [shape = 'u8[294912]{0}', space=vmem, size = 0x48000, scoped, tag = 'input window, operand 1, single buffered']
    #allocation6 [shape = 's32[1]{0}', space=sflag, size = 0x4, scoped, tag = 'scoped memory for tpu_custom_call.1']
    #allocation7 [shape = 'u8[131072]{0}', space=vmem, size = 0x20000, scoped, tag = 'output window, operand 0']
    %7 = vsyncpa [#allocation3], 0
    %s8 = scalar_lea.sflag [#allocation3], 1
    %9 = vsyncpa %s8, 0
    %10 = vsyncpa [#allocation6], 0
    %11 = vsyncpa [#allocation4], 0
    %s12 = scalar_lea.sflag [#allocation4], 1
    %13 = vsyncpa %s12, 0
    loop: start=0, step=1, limit=4
    $region2: #{tpu_custom_call.1} parent=1 // loop_pre_header
      _
    $region3: #{tpu_custom_call.1} parent=1 // loop_header
      %s15 = sphi 0, %s19
      %p16 = scmp.ge.s32.totalorder %s15, 4
      %s22 = sphi 0, %s34
      %s23 = sphi 0, %s30
      %s24 = sphi 0, %s22
      %s25 = sphi 0, %s23
      %s26 = sphi 0, %s24
      %s27 = sphi 0, %s25
      %s37 = sphi 0, %s39
      %s40 = sphi 0, %s37
      %s41 = sphi 0, %s40
      %s57 = sphi 0, %s41
      %s61 = sphi 0, %s61
      %s63 = sphi 0, %s61
      %s64 = sphi 0, %s63
      %s78 = sphi 0, %s64
      %s86 = sphi 0, %s88
      %s89 = sphi 0, %s86
      %s90 = sphi 0, %s89
      %s106 = sphi 0, %s90
    $region4: #{tpu_custom_call.1} parent=1 // loop_header_branch
      %18 = sbr.rel (%p16) target = $region8
    $region5: #{tpu_custom_call.1} parent=1 // loop_body
      %s20 = ssub.s32 %s15, 1
      %s21 = ssub.s32 %s15, 2
      %s28 = sadd.s32 1, %s23
      %p29 = scmp.ge.s32.totalorder %s28, 1
      %s30 = scalar_select %p29, 0, %s28
      %s31 = sadd.s32 1, %s22
      %s32 = scalar_select %p29, %s31, %s22
      %p33 = scmp.ge.s32.totalorder %s32, 2
      %s34 = scalar_select %p33, 0, %s32
      %s35 = ssub.s32 %s22, %s34
      %p36 = scmp.eq.s32.totalorder %s35, 0
      %s38 = sadd.s32 %s37, 1
      %s39 = scalar_select %p36, %s37, %s38
      %p42 = pneg %p36
      %p43 = scmp.eq.s32.totalorder %s15, 1
      %p44 = por %p42, %p43
      %p45 = scmp.ne.s32.totalorder %s37, %s40
      %p46 = scmp.eq.s32.totalorder %s15, 0
      %p47 = por %p45, %p46
      %p48 = scmp.ne.s32.totalorder %s37, %s40
      %p49 = scmp.eq.s32.totalorder %s20, 1
      %p50 = por %p48, %p49
      %p51 = scmp.ne.s32.totalorder %s40, %s41
      %p52 = scmp.eq.s32.totalorder %s20, 0
      %p53 = por %p51, %p52
      %p54 = scmp.ne.s32.totalorder %s40, %s41
      %p55 = scmp.eq.s32.totalorder %s21, 1
      %p56 = por %p54, %p55
      %p58 = scmp.ne.s32.totalorder %s41, %s57
      %p59 = scmp.eq.s32.totalorder %s21, 0
      %p60 = por %p58, %p59
      %s62 = sadd.s32 %s61, 1
      %p65 = scmp.eq.s32.totalorder %s15, 1
      %p66 = scmp.ne.s32.totalorder %s61, %s63
      %p67 = scmp.eq.s32.totalorder %s15, 0
      %p68 = por %p66, %p67
      %p69 = scmp.ne.s32.totalorder %s61, %s63
      %p70 = scmp.eq.s32.totalorder %s20, 1
      %p71 = por %p69, %p70
      %p72 = scmp.ne.s32.totalorder %s63, %s64
      %p73 = scmp.eq.s32.totalorder %s20, 0
      %p74 = por %p72, %p73
      %p75 = scmp.ne.s32.totalorder %s63, %s64
      %p76 = scmp.eq.s32.totalorder %s21, 1
      %p77 = por %p75, %p76
      %p79 = scmp.ne.s32.totalorder %s64, %s78
      %p80 = scmp.eq.s32.totalorder %s21, 0
      %p81 = por %p79, %p80
      %s82 = ssub.s32 %s22, %s34
      %s83 = ssub.s32 %s23, %s30
      %s84 = sor.u32 %s82, %s83
      %p85 = scmp.eq.s32.totalorder %s84, 0
      %s87 = sadd.s32 %s86, 1
      %s88 = scalar_select %p85, %s86, %s87
      %p91 = pneg %p85
      %p92 = scmp.eq.s32.totalorder %s15, 1
      %p93 = por %p91, %p92
      %p94 = scmp.ne.s32.totalorder %s86, %s89
      %p95 = scmp.eq.s32.totalorder %s15, 0
      %p96 = por %p94, %p95
      %p97 = scmp.ne.s32.totalorder %s86, %s89
      %p98 = scmp.eq.s32.totalorder %s20, 1
      %p99 = por %p97, %p98
      %p100 = scmp.ne.s32.totalorder %s89, %s90
      %p101 = scmp.eq.s32.totalorder %s20, 0
      %p102 = por %p100, %p101
      %p103 = scmp.ne.s32.totalorder %s89, %s90
      %p104 = scmp.eq.s32.totalorder %s21, 1
      %p105 = por %p103, %p104
      %p107 = scmp.ne.s32.totalorder %s90, %s106
      %p108 = scmp.eq.s32.totalorder %s21, 0
      %p109 = por %p107, %p108
      %p110 = scmp.le.s32.totalorder 1, %s15
      %p111 = scmp.lt.s32.totalorder %s15, 3
      %p112 = pnand %p110, %p111
      %p113 = pneg %p112
      // Predicated region
      $region9: #{tpu_custom_call.1} parent=5 // pred_check
        _
      $region10: #{tpu_custom_call.1} parent=5 // pred_check_branch
        %115 = sbr.rel (%p112) target = $region12
      $region11: #{tpu_custom_call.1} parent=5 // pred_region
        %s116 = ssub.s32 %s15, 1
        // Predicated region
        $region13: #{tpu_custom_call.1} parent=11 // pred_check
          %p117 = pneg %p74
        $region14: #{tpu_custom_call.1} parent=11 // pred_check_branch
          %119 = sbr.rel (%p117) target = $region16
        $region15: #{tpu_custom_call.1} parent=11 // pred_region
          %s121 = ssub.s32 9216, 9216
          %122 = vsyncadd [#allocation6], %s121
          %s123 = sshll.u32 [#allocation5], 4
          %s124 = int_to_ptr.vmem [resolvable:$true] %s123
          %129 = dma.hbm_to_vmem [thread:$0]  %s1, 9216, %s124, [#allocation6], 192, 192, 12
        $region16: #{tpu_custom_call.1} parent=11 // pred_fallthru
          _
      $region12: #{tpu_custom_call.1} parent=5 // pred_fallthru
        _
      %p130 = scmp.lt.s32.totalorder %s15, 2
      // Predicated region
      $region17: #{tpu_custom_call.1} parent=5 // pred_check
        %p131 = pneg %p130
      $region18: #{tpu_custom_call.1} parent=5 // pred_check_branch
        %133 = sbr.rel (%p131) target = $region20
      $region19: #{tpu_custom_call.1} parent=5 // pred_region
        // Predicated region
        $region21: #{tpu_custom_call.1} parent=19 // pred_check
          %p134 = pneg %p47
        $region22: #{tpu_custom_call.1} parent=19 // pred_check_branch
          %136 = sbr.rel (%p134) target = $region24
        $region23: #{tpu_custom_call.1} parent=19 // pred_region
          %s137 = sand.u32 %s37, 1
          %s138 = scalar_lea.sflag [#allocation3], %s137
          %s139 = sand.u32 %s37, 1
          %s140 = smul.addr %s139, 192
          %s141 = scalar_lea.vmem [#allocation2], %s140
          %s143 = ssub.s32 3072, 3072
          %144 = vsyncadd %s138, %s143
          %s145 = smul.addr %s22, 48
          %s146 = smul.addr %s145, 64
          %s147 = scalar_lea.hbm %s0, %s146
          %s148 = sshll.u32 %s141, 4
          %s149 = int_to_ptr.vmem [resolvable:$true] %s148
          %154 = dma.hbm_to_vmem [thread:$0]  %s147, 3072, %s149, %s138, 192, 192, 12
        $region24: #{tpu_custom_call.1} parent=19 // pred_fallthru
          _
      $region20: #{tpu_custom_call.1} parent=5 // pred_fallthru
        _
      %p155 = scmp.le.s32.totalorder 1, %s15
      %p156 = scmp.lt.s32.totalorder %s15, 3
      %p157 = pnand %p155, %p156
      %p158 = pneg %p157
      // Predicated region
      $region25: #{tpu_custom_call.1} parent=5 // pred_check
        _
      $region26: #{tpu_custom_call.1} parent=5 // pred_check_branch
        %160 = sbr.rel (%p157) target = $region28
      $region27: #{tpu_custom_call.1} parent=5 // pred_region
        %s161 = ssub.s32 %s15, 1
        %s162 = sand.u32 %s40, 1
        %s163 = scalar_lea.sflag [#allocation3], %s162
        %s164 = sand.u32 %s40, 1
        %s165 = smul.addr %s164, 192
        %s166 = scalar_lea.vmem [#allocation2], %s165
        // Predicated region
        $region29: #{tpu_custom_call.1} parent=27 // pred_check
          %p167 = pneg %p53
        $region30: #{tpu_custom_call.1} parent=27 // pred_check_branch
          %169 = sbr.rel (%p167) target = $region32
        $region31: #{tpu_custom_call.1} parent=27 // pred_region
          %170 = dma.done %s163, 3072
        $region32: #{tpu_custom_call.1} parent=27 // pred_fallthru
          _
        // Predicated region
        $region33: #{tpu_custom_call.1} parent=27 // pred_check
          %p171 = pneg %p74
        $region34: #{tpu_custom_call.1} parent=27 // pred_check_branch
          %173 = sbr.rel (%p171) target = $region36
        $region35: #{tpu_custom_call.1} parent=27 // pred_region
          %174 = dma.done [#allocation6], 9216
        $region36: #{tpu_custom_call.1} parent=27 // pred_fallthru
          _
        %s175 = sand.u32 %s40, 1
        %s176 = scalar_lea.sflag [#allocation3], %s175
        %s177 = sand.u32 %s40, 1
        %s178 = smul.addr %s177, 192
        %s179 = scalar_lea.vmem [#allocation2], %s178
        %p180 = pneg %p53
        %p181 = pneg %p50
        %p182 = pneg %p74
        %p183 = pneg %p71
        %p184 = pneg %p102
        %p185 = pneg %p99
        %s186 = sand.u32 %s89, 1
        %s187 = scalar_lea.sflag [#allocation4], %s186
        %s188 = sand.u32 %s89, 1
        %s189 = smul.addr %s188, 128
        %s190 = scalar_lea.vmem [#allocation7], %s189
        %s191 = smul.u32 16, %s25
        %v193 = vld [vmem:[%s166] sm:$0xff]
        %v194 = vld [vmem:[%s166 + $0x8] sm:$0xf]
        %v195 = vld [vmem:[%s166 + $0xc] sm:$0xff]
        %v196 = vld [vmem:[%s166 + $0x14] sm:$0xf]
        %v197 = vld [vmem:[%s166 + $0x18] sm:$0xff]
        %v198 = vld [vmem:[%s166 + $0x20] sm:$0xf]
        %v199 = vld [vmem:[%s166 + $0x24] sm:$0xff]
        %v200 = vld [vmem:[%s166 + $0x2c] sm:$0xf]
        %v201 = vld [vmem:[%s166 + $0x30] sm:$0xff]
        %v202 = vld [vmem:[%s166 + $0x38] sm:$0xf]
        %v203 = vld [vmem:[%s166 + $0x3c] sm:$0xff]
        %v204 = vld [vmem:[%s166 + $0x44] sm:$0xf]
        %v205 = vld [vmem:[%s166 + $0x48] sm:$0xff]
        %v206 = vld [vmem:[%s166 + $0x50] sm:$0xf]
        %v207 = vld [vmem:[%s166 + $0x54] sm:$0xff]
        %v208 = vld [vmem:[%s166 + $0x5c] sm:$0xf]
        %v209 = vld [vmem:[%s166 + $0x60] sm:$0xff]
        %v210 = vld [vmem:[%s166 + $0x68] sm:$0xf]
        %v211 = vld [vmem:[%s166 + $0x6c] sm:$0xff]
        %v212 = vld [vmem:[%s166 + $0x74] sm:$0xf]
        %v213 = vld [vmem:[%s166 + $0x78] sm:$0xff]
        %v214 = vld [vmem:[%s166 + $0x80] sm:$0xf]
        %v215 = vld [vmem:[%s166 + $0x84] sm:$0xff]
        %v216 = vld [vmem:[%s166 + $0x8c] sm:$0xf]
        %v217 = vld [vmem:[%s166 + $0x90] sm:$0xff]
        %v218 = vld [vmem:[%s166 + $0x98] sm:$0xf]
        %v219 = vld [vmem:[%s166 + $0x9c] sm:$0xff]
        %v220 = vld [vmem:[%s166 + $0xa4] sm:$0xf]
        %v221 = vld [vmem:[%s166 + $0xa8] sm:$0xff]
        %v222 = vld [vmem:[%s166 + $0xb0] sm:$0xf]
        %v223 = vld [vmem:[%s166 + $0xb4] sm:$0xff]
        %v224 = vld [vmem:[%s166 + $0xbc] sm:$0xf]
        %v225 = vld [vmem:[#allocation5] sm:$0xff]
        %v226 = vld [vmem:[#allocation5 + $0x8] sm:$0xf]
        %v227 = vld [vmem:[#allocation5 + $0xc] sm:$0xff]
        %v228 = vld [vmem:[#allocation5 + $0x14] sm:$0xf]
        %v229 = vld [vmem:[#allocation5 + $0x18] sm:$0xff]
        %v230 = vld [vmem:[#allocation5 + $0x20] sm:$0xf]
        %v231 = vld [vmem:[#allocation5 + $0x24] sm:$0xff]
        %v232 = vld [vmem:[#allocation5 + $0x2c] sm:$0xf]
        %v233 = vld [vmem:[#allocation5 + $0x30] sm:$0xff]
        %v234 = vld [vmem:[#allocation5 + $0x38] sm:$0xf]
        %v235 = vld [vmem:[#allocation5 + $0x3c] sm:$0xff]
        %v236 = vld [vmem:[#allocation5 + $0x44] sm:$0xf]
        %v237 = vld [vmem:[#allocation5 + $0x48] sm:$0xff]
        %v238 = vld [vmem:[#allocation5 + $0x50] sm:$0xf]
        %v239 = vld [vmem:[#allocation5 + $0x54] sm:$0xff]
        %v240 = vld [vmem:[#allocation5 + $0x5c] sm:$0xf]
        %v241 = vld [vmem:[#allocation5 + $0x60] sm:$0xff]
        %v242 = vld [vmem:[#allocation5 + $0x68] sm:$0xf]
        %v243 = vld [vmem:[#allocation5 + $0x6c] sm:$0xff]
        %v244 = vld [vmem:[#allocation5 + $0x74] sm:$0xf]
        %v245 = vld [vmem:[#allocation5 + $0x78] sm:$0xff]
        %v246 = vld [vmem:[#allocation5 + $0x80] sm:$0xf]
        %v247 = vld [vmem:[#allocation5 + $0x84] sm:$0xff]
        %v248 = vld [vmem:[#allocation5 + $0x8c] sm:$0xf]
        %v249 = vld [vmem:[#allocation5 + $0x90] sm:$0xff]
        %v250 = vld [vmem:[#allocation5 + $0x98] sm:$0xf]
        %v251 = vld [vmem:[#allocation5 + $0x9c] sm:$0xff]
        %v252 = vld [vmem:[#allocation5 + $0xa4] sm:$0xf]
        %v253 = vld [vmem:[#allocation5 + $0xa8] sm:$0xff]
        %v254 = vld [vmem:[#allocation5 + $0xb0] sm:$0xf]
        %v255 = vld [vmem:[#allocation5 + $0xb4] sm:$0xff]
        %v256 = vld [vmem:[#allocation5 + $0xbc] sm:$0xf]
        %v257 = vld [vmem:[#allocation5 + $0xc0] sm:$0xff]
        %v258 = vld [vmem:[#allocation5 + $0xc8] sm:$0xf]
        %v259 = vld [vmem:[#allocation5 + $0xcc] sm:$0xff]
        %v260 = vld [vmem:[#allocation5 + $0xd4] sm:$0xf]
        %v261 = vld [vmem:[#allocation5 + $0xd8] sm:$0xff]
        %v262 = vld [vmem:[#allocation5 + $0xe0] sm:$0xf]
        %v263 = vld [vmem:[#allocation5 + $0xe4] sm:$0xff]
        %v264 = vld [vmem:[#allocation5 + $0xec] sm:$0xf]
        %v265 = vld [vmem:[#allocation5 + $0xf0] sm:$0xff]
        %v266 = vld [vmem:[#allocation5 + $0xf8] sm:$0xf]
        %v267 = vld [vmem:[#allocation5 + $0xfc] sm:$0xff]
        %v268 = vld [vmem:[#allocation5 + $0x104] sm:$0xf]
        %v269 = vld [vmem:[#allocation5 + $0x108] sm:$0xff]
        %v270 = vld [vmem:[#allocation5 + $0x110] sm:$0xf]
        %v271 = vld [vmem:[#allocation5 + $0x114] sm:$0xff]
        %v272 = vld [vmem:[#allocation5 + $0x11c] sm:$0xf]
        %v273 = vld [vmem:[#allocation5 + $0x120] sm:$0xff]
        %v274 = vld [vmem:[#allocation5 + $0x128] sm:$0xf]
        %v275 = vld [vmem:[#allocation5 + $0x12c] sm:$0xff]
        %v276 = vld [vmem:[#allocation5 + $0x134] sm:$0xf]
        %v277 = vld [vmem:[#allocation5 + $0x138] sm:$0xff]
        %v278 = vld [vmem:[#allocation5 + $0x140] sm:$0xf]
        %v279 = vld [vmem:[#allocation5 + $0x144] sm:$0xff]
        %v280 = vld [vmem:[#allocation5 + $0x14c] sm:$0xf]
        %v281 = vld [vmem:[#allocation5 + $0x150] sm:$0xff]
        %v282 = vld [vmem:[#allocation5 + $0x158] sm:$0xf]
        %v283 = vld [vmem:[#allocation5 + $0x15c] sm:$0xff]
        %v284 = vld [vmem:[#allocation5 + $0x164] sm:$0xf]
        %v285 = vld [vmem:[#allocation5 + $0x168] sm:$0xff]
        %v286 = vld [vmem:[#allocation5 + $0x170] sm:$0xf]
        %v287 = vld [vmem:[#allocation5 + $0x174] sm:$0xff]
        %v288 = vld [vmem:[#allocation5 + $0x17c] sm:$0xf]
        %v289 = vld [vmem:[#allocation5 + $0x180] sm:$0xff]
        %v290 = vld [vmem:[#allocation5 + $0x188] sm:$0xf]
        %v291 = vld [vmem:[#allocation5 + $0x18c] sm:$0xff]
        %v292 = vld [vmem:[#allocation5 + $0x194] sm:$0xf]
        %v293 = vld [vmem:[#allocation5 + $0x198] sm:$0xff]
        %v294 = vld [vmem:[#allocation5 + $0x1a0] sm:$0xf]
        %v295 = vld [vmem:[#allocation5 + $0x1a4] sm:$0xff]
        %v296 = vld [vmem:[#allocation5 + $0x1ac] sm:$0xf]
        %v297 = vld [vmem:[#allocation5 + $0x1b0] sm:$0xff]
        %v298 = vld [vmem:[#allocation5 + $0x1b8] sm:$0xf]
        %v299 = vld [vmem:[#allocation5 + $0x1bc] sm:$0xff]
        %v300 = vld [vmem:[#allocation5 + $0x1c4] sm:$0xf]
        %v301 = vld [vmem:[#allocation5 + $0x1c8] sm:$0xff]
        %v302 = vld [vmem:[#allocation5 + $0x1d0] sm:$0xf]
        %v303 = vld [vmem:[#allocation5 + $0x1d4] sm:$0xff]
        %v304 = vld [vmem:[#allocation5 + $0x1dc] sm:$0xf]
        %v305 = vld [vmem:[#allocation5 + $0x1e0] sm:$0xff]
        %v306 = vld [vmem:[#allocation5 + $0x1e8] sm:$0xf]
        %v307 = vld [vmem:[#allocation5 + $0x1ec] sm:$0xff]
        %v308 = vld [vmem:[#allocation5 + $0x1f4] sm:$0xf]
        %v309 = vld [vmem:[#allocation5 + $0x1f8] sm:$0xff]
        %v310 = vld [vmem:[#allocation5 + $0x200] sm:$0xf]
        %v311 = vld [vmem:[#allocation5 + $0x204] sm:$0xff]
        %v312 = vld [vmem:[#allocation5 + $0x20c] sm:$0xf]
        %v313 = vld [vmem:[#allocation5 + $0x210] sm:$0xff]
        %v314 = vld [vmem:[#allocation5 + $0x218] sm:$0xf]
        %v315 = vld [vmem:[#allocation5 + $0x21c] sm:$0xff]
        %v316 = vld [vmem:[#allocation5 + $0x224] sm:$0xf]
        %v317 = vld [vmem:[#allocation5 + $0x228] sm:$0xff]
        %v318 = vld [vmem:[#allocation5 + $0x230] sm:$0xf]
        %v319 = vld [vmem:[#allocation5 + $0x234] sm:$0xff]
        %v320 = vld [vmem:[#allocation5 + $0x23c] sm:$0xf]
        %v353 = vunpack.c.l.b16 %v193
        %v354 = vunpack.c.h.b16 %v193
        %v355 = vunpack.c.l.b16 %v194
        %v356 = vunpack.c.l.b16 %v195
        %v357 = vunpack.c.h.b16 %v195
        %v358 = vunpack.c.l.b16 %v196
        %v359 = vunpack.c.l.b16 %v197
        %v360 = vunpack.c.h.b16 %v197
        %v361 = vunpack.c.l.b16 %v198
        %v362 = vunpack.c.l.b16 %v199
        %v363 = vunpack.c.h.b16 %v199
        %v364 = vunpack.c.l.b16 %v200
        %v365 = vunpack.c.l.b16 %v201
        %v366 = vunpack.c.h.b16 %v201
        %v367 = vunpack.c.l.b16 %v202
        %v368 = vunpack.c.l.b16 %v203
        %v369 = vunpack.c.h.b16 %v203
        %v370 = vunpack.c.l.b16 %v204
        %v371 = vunpack.c.l.b16 %v205
        %v372 = vunpack.c.h.b16 %v205
        %v373 = vunpack.c.l.b16 %v206
        %v374 = vunpack.c.l.b16 %v207
        %v375 = vunpack.c.h.b16 %v207
        %v376 = vunpack.c.l.b16 %v208
        %v377 = vunpack.c.l.b16 %v209
        %v378 = vunpack.c.h.b16 %v209
        %v379 = vunpack.c.l.b16 %v210
        %v380 = vunpack.c.l.b16 %v211
        %v381 = vunpack.c.h.b16 %v211
        %v382 = vunpack.c.l.b16 %v212
        %v383 = vunpack.c.l.b16 %v213
        %v384 = vunpack.c.h.b16 %v213
        %v385 = vunpack.c.l.b16 %v214
        %v386 = vunpack.c.l.b16 %v215
        %v387 = vunpack.c.h.b16 %v215
        %v388 = vunpack.c.l.b16 %v216
        %v389 = vunpack.c.l.b16 %v217
        %v390 = vunpack.c.h.b16 %v217
        %v391 = vunpack.c.l.b16 %v218
        %v392 = vunpack.c.l.b16 %v219
        %v393 = vunpack.c.h.b16 %v219
        %v394 = vunpack.c.l.b16 %v220
        %v395 = vunpack.c.l.b16 %v221
        %v396 = vunpack.c.h.b16 %v221
        %v397 = vunpack.c.l.b16 %v222
        %v398 = vunpack.c.l.b16 %v223
        %v399 = vunpack.c.h.b16 %v223
        %v400 = vunpack.c.l.b16 %v224
        %v401 = vpack.c.b16 %v356, %v353
        %v402 = vpack.c.b16 %v357, %v354
        %v403 = vpack.c.b16 %v358, %v355
        %v404 = vpack.c.b16 %v362, %v359
        %v405 = vpack.c.b16 %v363, %v360
        %v406 = vpack.c.b16 %v364, %v361
        %v407 = vpack.c.b16 %v368, %v365
        %v408 = vpack.c.b16 %v369, %v366
        %v409 = vpack.c.b16 %v370, %v367
        %v410 = vpack.c.b16 %v374, %v371
        %v411 = vpack.c.b16 %v375, %v372
        %v412 = vpack.c.b16 %v376, %v373
        %v413 = vpack.c.b16 %v380, %v377
        %v414 = vpack.c.b16 %v381, %v378
        %v415 = vpack.c.b16 %v382, %v379
        %v416 = vpack.c.b16 %v386, %v383
        %v417 = vpack.c.b16 %v387, %v384
        %v418 = vpack.c.b16 %v388, %v385
        %v419 = vpack.c.b16 %v392, %v389
        %v420 = vpack.c.b16 %v393, %v390
        %v421 = vpack.c.b16 %v394, %v391
        %v422 = vpack.c.b16 %v398, %v395
        %v423 = vpack.c.b16 %v399, %v396
        %v424 = vpack.c.b16 %v400, %v397
        %v545 = vunpack.c.h.b16 %v225
        %v546 = vunpack.c.l.b16 %v226
        %v547 = vunpack.c.h.b16 %v227
        %v548 = vunpack.c.l.b16 %v228
        %v549 = vunpack.c.h.b16 %v229
        %v550 = vunpack.c.l.b16 %v230
        %v551 = vunpack.c.h.b16 %v231
        %v552 = vunpack.c.l.b16 %v232
        %v553 = vunpack.c.h.b16 %v233
        %v554 = vunpack.c.l.b16 %v234
        %v555 = vunpack.c.h.b16 %v235
        %v556 = vunpack.c.l.b16 %v236
        %v557 = vunpack.c.h.b16 %v237
        %v558 = vunpack.c.l.b16 %v238
        %v559 = vunpack.c.h.b16 %v239
        %v560 = vunpack.c.l.b16 %v240
        %v561 = vunpack.c.h.b16 %v241
        %v562 = vunpack.c.l.b16 %v242
        %v563 = vunpack.c.h.b16 %v243
        %v564 = vunpack.c.l.b16 %v244
        %v565 = vunpack.c.h.b16 %v245
        %v566 = vunpack.c.l.b16 %v246
        %v567 = vunpack.c.h.b16 %v247
        %v568 = vunpack.c.l.b16 %v248
        %v569 = vunpack.c.h.b16 %v249
        %v570 = vunpack.c.l.b16 %v250
        %v571 = vunpack.c.h.b16 %v251
        %v572 = vunpack.c.l.b16 %v252
        %v573 = vunpack.c.h.b16 %v253
        %v574 = vunpack.c.l.b16 %v254
        %v575 = vunpack.c.h.b16 %v255
        %v576 = vunpack.c.l.b16 %v256
        %v577 = vunpack.c.h.b16 %v257
        %v578 = vunpack.c.l.b16 %v258
        %v579 = vunpack.c.h.b16 %v259
        %v580 = vunpack.c.l.b16 %v260
        %v581 = vunpack.c.h.b16 %v261
        %v582 = vunpack.c.l.b16 %v262
        %v583 = vunpack.c.h.b16 %v263
        %v584 = vunpack.c.l.b16 %v264
        %v585 = vunpack.c.h.b16 %v265
        %v586 = vunpack.c.l.b16 %v266
        %v587 = vunpack.c.h.b16 %v267
        %v588 = vunpack.c.l.b16 %v268
        %v589 = vunpack.c.h.b16 %v269
        %v590 = vunpack.c.l.b16 %v270
        %v591 = vunpack.c.h.b16 %v271
        %v592 = vunpack.c.l.b16 %v272
        %v593 = vunpack.c.h.b16 %v273
        %v594 = vunpack.c.l.b16 %v274
        %v595 = vunpack.c.h.b16 %v275
        %v596 = vunpack.c.l.b16 %v276
        %v597 = vunpack.c.h.b16 %v277
        %v598 = vunpack.c.l.b16 %v278
        %v599 = vunpack.c.h.b16 %v279
        %v600 = vunpack.c.l.b16 %v280
        %v601 = vunpack.c.h.b16 %v281
        %v602 = vunpack.c.l.b16 %v282
        %v603 = vunpack.c.h.b16 %v283
        %v604 = vunpack.c.l.b16 %v284
        %v605 = vunpack.c.h.b16 %v285
        %v606 = vunpack.c.l.b16 %v286
        %v607 = vunpack.c.h.b16 %v287
        %v608 = vunpack.c.l.b16 %v288
        %v609 = vunpack.c.h.b16 %v289
        %v610 = vunpack.c.l.b16 %v290
        %v611 = vunpack.c.h.b16 %v291
        %v612 = vunpack.c.l.b16 %v292
        %v613 = vunpack.c.h.b16 %v293
        %v614 = vunpack.c.l.b16 %v294
        %v615 = vunpack.c.h.b16 %v295
        %v616 = vunpack.c.l.b16 %v296
        %v617 = vunpack.c.h.b16 %v297
        %v618 = vunpack.c.l.b16 %v298
        %v619 = vunpack.c.h.b16 %v299
        %v620 = vunpack.c.l.b16 %v300
        %v621 = vunpack.c.h.b16 %v301
        %v622 = vunpack.c.l.b16 %v302
        %v623 = vunpack.c.h.b16 %v303
        %v624 = vunpack.c.l.b16 %v304
        %v625 = vunpack.c.h.b16 %v305
        %v626 = vunpack.c.l.b16 %v306
        %v627 = vunpack.c.h.b16 %v307
        %v628 = vunpack.c.l.b16 %v308
        %v629 = vunpack.c.h.b16 %v309
        %v630 = vunpack.c.l.b16 %v310
        %v631 = vunpack.c.h.b16 %v311
        %v632 = vunpack.c.l.b16 %v312
        %v633 = vunpack.c.h.b16 %v313
        %v634 = vunpack.c.l.b16 %v314
        %v635 = vunpack.c.h.b16 %v315
        %v636 = vunpack.c.l.b16 %v316
        %v637 = vunpack.c.h.b16 %v317
        %v638 = vunpack.c.l.b16 %v318
        %v639 = vunpack.c.h.b16 %v319
        %v640 = vunpack.c.l.b16 %v320
        %v641 = vpack.c.b16 %v547, %v545
        %v642 = vpack.c.b16 %v548, %v546
        %v643 = vpack.c.b16 %v551, %v549
        %v644 = vpack.c.b16 %v552, %v550
        %v645 = vpack.c.b16 %v555, %v553
        %v646 = vpack.c.b16 %v556, %v554
        %v647 = vpack.c.b16 %v559, %v557
        %v648 = vpack.c.b16 %v560, %v558
        %v649 = vpack.c.b16 %v563, %v561
        %v650 = vpack.c.b16 %v564, %v562
        %v651 = vpack.c.b16 %v567, %v565
        %v652 = vpack.c.b16 %v568, %v566
        %v653 = vpack.c.b16 %v571, %v569
        %v654 = vpack.c.b16 %v572, %v570
        %v655 = vpack.c.b16 %v575, %v573
        %v656 = vpack.c.b16 %v576, %v574
        %v657 = vpack.c.b16 %v579, %v577
        %v658 = vpack.c.b16 %v580, %v578
        %v659 = vpack.c.b16 %v583, %v581
        %v660 = vpack.c.b16 %v584, %v582
        %v661 = vpack.c.b16 %v587, %v585
        %v662 = vpack.c.b16 %v588, %v586
        %v663 = vpack.c.b16 %v591, %v589
        %v664 = vpack.c.b16 %v592, %v590
        %v665 = vpack.c.b16 %v595, %v593
        %v666 = vpack.c.b16 %v596, %v594
        %v667 = vpack.c.b16 %v599, %v597
        %v668 = vpack.c.b16 %v600, %v598
        %v669 = vpack.c.b16 %v603, %v601
        %v670 = vpack.c.b16 %v604, %v602
        %v671 = vpack.c.b16 %v607, %v605
        %v672 = vpack.c.b16 %v608, %v606
        %v673 = vpack.c.b16 %v611, %v609
        %v674 = vpack.c.b16 %v612, %v610
        %v675 = vpack.c.b16 %v615, %v613
        %v676 = vpack.c.b16 %v616, %v614
        %v677 = vpack.c.b16 %v619, %v617
        %v678 = vpack.c.b16 %v620, %v618
        %v679 = vpack.c.b16 %v623, %v621
        %v680 = vpack.c.b16 %v624, %v622
        %v681 = vpack.c.b16 %v627, %v625
        %v682 = vpack.c.b16 %v628, %v626
        %v683 = vpack.c.b16 %v631, %v629
        %v684 = vpack.c.b16 %v632, %v630
        %v685 = vpack.c.b16 %v635, %v633
        %v686 = vpack.c.b16 %v636, %v634
        %v687 = vpack.c.b16 %v639, %v637
        %v688 = vpack.c.b16 %v640, %v638
        %737 = vmatprep.subr.bf16.mxu0 %v642
        %738 = vmatpush1.bf16.msra.mxu0 %v641
        %739 = vmatprep.subr.bf16.mxu0 %v644
        %740 = vmatpush1.bf16.msra.mxu0 %v643
        %741 = vmatprep.subr.bf16.mxu0 %v646
        %742 = vmatpush1.bf16.msra.mxu0 %v645
        %743 = vmatprep.subr.bf16.mxu0 %v648
        %744 = vmatpush1.bf16.msra.mxu0 %v647
        %745 = vmatprep.subr.bf16.mxu0 %v650
        %746 = vmatpush1.bf16.msra.mxu0 %v649
        %747 = vmatprep.subr.bf16.mxu0 %v652
        %748 = vmatpush1.bf16.msra.mxu0 %v651
        %749 = vmatprep.subr.bf16.mxu0 %v654
        %750 = vmatpush1.bf16.msra.mxu0 %v653
        %751 = vmatprep.subr.bf16.mxu0 %v656
        %752 = vmatpush1.bf16.msra.mxu0 %v655
        %753 = vmatprep.subr.bf16.mxu0 %v658
        %754 = vmatpush1.bf16.msra.mxu0 %v657
        %755 = vmatprep.subr.bf16.mxu0 %v660
        %756 = vmatpush1.bf16.msra.mxu0 %v659
        %757 = vmatprep.subr.bf16.mxu0 %v662
        %758 = vmatpush1.bf16.msra.mxu0 %v661
        %759 = vmatprep.subr.bf16.mxu0 %v664
        %760 = vmatpush1.bf16.msra.mxu0 %v663
        %761 = vmatprep.subr.bf16.mxu0 %v666
        %762 = vmatpush1.bf16.msra.mxu0 %v665
        %763 = vmatprep.subr.bf16.mxu0 %v668
        %764 = vmatpush1.bf16.msra.mxu0 %v667
        %765 = vmatprep.subr.bf16.mxu0 %v670
        %766 = vmatpush1.bf16.msra.mxu0 %v669
        %767 = vmatprep.subr.bf16.mxu0 %v672
        %768 = vmatpush1.bf16.msra.mxu0 %v671
        %769 = vmatprep.mubr.bf16.mxu0 %v402
        %770 = vmatmul.mubr.bf16.gmra.mrb[0].mxu0 %v401
        %v771 = vpop.f32.mrb[0].mxu0
        %v772 = vadd.f32 0.0, %v771
        %v773 = vpop.f32.mrb[0].mxu0
        %v774 = vadd.f32 0.0, %v773
        %v775 = vpop.f32.mrb[0].mxu0
        %v776 = vadd.f32 0.0, %v775
        %v777 = vpop.f32.mrb[0].mxu0
        %v778 = vadd.f32 0.0, %v777
        %779 = vmatprep.mubr.bf16.mxu0 %v405
        %780 = vmatmul.mubr.bf16.gmra.mrb[0].mxu0 %v404
        %v781 = vpop.f32.mrb[0].mxu0
        %v782 = vadd.f32 0.0, %v781
        %v783 = vpop.f32.mrb[0].mxu0
        %v784 = vadd.f32 0.0, %v783
        %v785 = vpop.f32.mrb[0].mxu0
        %v786 = vadd.f32 0.0, %v785
        %v787 = vpop.f32.mrb[0].mxu0
        %v788 = vadd.f32 0.0, %v787
        %789 = vmatprep.mubr.bf16.mxu0 %v408
        %790 = vmatmul.mubr.bf16.gmra.mrb[0].mxu0 %v407
        %v791 = vpop.f32.mrb[0].mxu0
        %v792 = vadd.f32 0.0, %v791
        %v793 = vpop.f32.mrb[0].mxu0
        %v794 = vadd.f32 0.0, %v793
        %v795 = vpop.f32.mrb[0].mxu0
        %v796 = vadd.f32 0.0, %v795
        %v797 = vpop.f32.mrb[0].mxu0
        %v798 = vadd.f32 0.0, %v797
        %799 = vmatprep.mubr.bf16.mxu0 %v411
        %800 = vmatmul.mubr.bf16.gmra.mrb[0].mxu0 %v410
        %v801 = vpop.f32.mrb[0].mxu0
        %v802 = vadd.f32 0.0, %v801
        %v803 = vpop.f32.mrb[0].mxu0
        %v804 = vadd.f32 0.0, %v803
        %v805 = vpop.f32.mrb[0].mxu0
        %v806 = vadd.f32 0.0, %v805
        %v807 = vpop.f32.mrb[0].mxu0
        %v808 = vadd.f32 0.0, %v807
        %809 = vmatprep.mubr.bf16.mxu0 %v414
        %810 = vmatmul.mubr.bf16.gmra.mrb[0].mxu0 %v413
        %v811 = vpop.f32.mrb[0].mxu0
        %v812 = vadd.f32 0.0, %v811
        %v813 = vpop.f32.mrb[0].mxu0
        %v814 = vadd.f32 0.0, %v813
        %v815 = vpop.f32.mrb[0].mxu0
        %v816 = vadd.f32 0.0, %v815
        %v817 = vpop.f32.mrb[0].mxu0
        %v818 = vadd.f32 0.0, %v817
        %819 = vmatprep.mubr.bf16.mxu0 %v417
        %820 = vmatmul.mubr.bf16.gmra.mrb[0].mxu0 %v416
        %v821 = vpop.f32.mrb[0].mxu0
        %v822 = vadd.f32 0.0, %v821
        %v823 = vpop.f32.mrb[0].mxu0
        %v824 = vadd.f32 0.0, %v823
        %v825 = vpop.f32.mrb[0].mxu0
        %v826 = vadd.f32 0.0, %v825
        %v827 = vpop.f32.mrb[0].mxu0
        %v828 = vadd.f32 0.0, %v827
        %829 = vmatprep.mubr.bf16.mxu0 %v420
        %830 = vmatmul.mubr.bf16.gmra.mrb[0].mxu0 %v419
        %v831 = vpop.f32.mrb[0].mxu0
        %v832 = vadd.f32 0.0, %v831
        %v833 = vpop.f32.mrb[0].mxu0
        %v834 = vadd.f32 0.0, %v833
        %v835 = vpop.f32.mrb[0].mxu0
        %v836 = vadd.f32 0.0, %v835
        %v837 = vpop.f32.mrb[0].mxu0
        %v838 = vadd.f32 0.0, %v837
        %839 = vmatprep.mubr.bf16.mxu0 %v423
        %840 = vmatmul.mubr.bf16.gmra.mrb[0].mxu0 %v422
        %v841 = vpop.f32.mrb[0].mxu0
        %v842 = vadd.f32 0.0, %v841
        %v843 = vpop.f32.mrb[0].mxu0
        %v844 = vadd.f32 0.0, %v843
        %v845 = vpop.f32.mrb[0].mxu0
        %v846 = vadd.f32 0.0, %v845
        %v847 = vpop.f32.mrb[0].mxu0
        %v848 = vadd.f32 0.0, %v847
        %849 = vdwg.mxu0
        %850 = vmatprep.subr.bf16.mxu0 %v674
        %851 = vmatpush1.bf16.msra.mxu0 %v673
        %852 = vmatprep.subr.bf16.mxu0 %v676
        %853 = vmatpush1.bf16.msra.mxu0 %v675
        %854 = vmatprep.subr.bf16.mxu0 %v678
        %855 = vmatpush1.bf16.msra.mxu0 %v677
        %856 = vmatprep.subr.bf16.mxu0 %v680
        %857 = vmatpush1.bf16.msra.mxu0 %v679
        %858 = vmatprep.subr.bf16.mxu0 %v682
        %859 = vmatpush1.bf16.msra.mxu0 %v681
        %860 = vmatprep.subr.bf16.mxu0 %v684
        %861 = vmatpush1.bf16.msra.mxu0 %v683
        %862 = vmatprep.subr.bf16.mxu0 %v686
        %863 = vmatpush1.bf16.msra.mxu0 %v685
        %864 = vmatprep.subr.bf16.mxu0 %v688
        %865 = vmatpush1.bf16.msra.mxu0 %v687
        %866 = vmatprep.subr.bf16.mxu0 0
        %867 = vmatpush1.bf16.msra.mxu0 0
        %868 = vmatprep.subr.bf16.mxu0 0
        %869 = vmatpush1.bf16.msra.mxu0 0
        %870 = vmatprep.subr.bf16.mxu0 0
        %871 = vmatpush1.bf16.msra.mxu0 0
        %872 = vmatprep.subr.bf16.mxu0 0
        %873 = vmatpush1.bf16.msra.mxu0 0
        %874 = vmatprep.subr.bf16.mxu0 0
        %875 = vmatpush1.bf16.msra.mxu0 0
        %876 = vmatprep.subr.bf16.mxu0 0
        %877 = vmatpush1.bf16.msra.mxu0 0
        %878 = vmatprep.subr.bf16.mxu0 0
        %879 = vmatpush1.bf16.msra.mxu0 0
        %880 = vmatprep.subr.bf16.mxu0 0
        %881 = vmatpush1.bf16.msra.mxu0 0
        %882 = vmatprep.mubr.bf16.mxu0 0
        %883 = vmatmul.mubr.bf16.gmra.mrb[0].mxu0 %v403
        %v884 = vpop.f32.mrb[0].mxu0
        %v885 = vadd.f32 %v772, %v884
        %v886 = vpop.f32.mrb[0].mxu0
        %v887 = vadd.f32 %v774, %v886
        %v888 = vpop.f32.mrb[0].mxu0
        %v889 = vadd.f32 %v776, %v888
        %v890 = vpop.f32.mrb[0].mxu0
        %v891 = vadd.f32 %v778, %v890
        %892 = vmatprep.mubr.bf16.mxu0 0
        %893 = vmatmul.mubr.bf16.gmra.mrb[0].mxu0 %v406
        %v894 = vpop.f32.mrb[0].mxu0
        %v895 = vadd.f32 %v782, %v894
        %v896 = vpop.f32.mrb[0].mxu0
        %v897 = vadd.f32 %v784, %v896
        %v898 = vpop.f32.mrb[0].mxu0
        %v899 = vadd.f32 %v786, %v898
        %v900 = vpop.f32.mrb[0].mxu0
        %v901 = vadd.f32 %v788, %v900
        %902 = vmatprep.mubr.bf16.mxu0 0
        %903 = vmatmul.mubr.bf16.gmra.mrb[0].mxu0 %v409
        %v904 = vpop.f32.mrb[0].mxu0
        %v905 = vadd.f32 %v792, %v904
        %v906 = vpop.f32.mrb[0].mxu0
        %v907 = vadd.f32 %v794, %v906
        %v908 = vpop.f32.mrb[0].mxu0
        %v909 = vadd.f32 %v796, %v908
        %v910 = vpop.f32.mrb[0].mxu0
        %v911 = vadd.f32 %v798, %v910
        %912 = vmatprep.mubr.bf16.mxu0 0
        %913 = vmatmul.mubr.bf16.gmra.mrb[0].mxu0 %v412
        %v914 = vpop.f32.mrb[0].mxu0
        %v915 = vadd.f32 %v802, %v914
        %v916 = vpop.f32.mrb[0].mxu0
        %v917 = vadd.f32 %v804, %v916
        %v918 = vpop.f32.mrb[0].mxu0
        %v919 = vadd.f32 %v806, %v918
        %v920 = vpop.f32.mrb[0].mxu0
        %v921 = vadd.f32 %v808, %v920
        %922 = vmatprep.mubr.bf16.mxu0 0
        %923 = vmatmul.mubr.bf16.gmra.mrb[0].mxu0 %v415
        %v924 = vpop.f32.mrb[0].mxu0
        %v925 = vadd.f32 %v812, %v924
        %v926 = vpop.f32.mrb[0].mxu0
        %v927 = vadd.f32 %v814, %v926
        %v928 = vpop.f32.mrb[0].mxu0
        %v929 = vadd.f32 %v816, %v928
        %v930 = vpop.f32.mrb[0].mxu0
        %v931 = vadd.f32 %v818, %v930
        %932 = vmatprep.mubr.bf16.mxu0 0
        %933 = vmatmul.mubr.bf16.gmra.mrb[0].mxu0 %v418
        %v934 = vpop.f32.mrb[0].mxu0
        %v935 = vadd.f32 %v822, %v934
        %v936 = vpop.f32.mrb[0].mxu0
        %v937 = vadd.f32 %v824, %v936
        %v938 = vpop.f32.mrb[0].mxu0
        %v939 = vadd.f32 %v826, %v938
        %v940 = vpop.f32.mrb[0].mxu0
        %v941 = vadd.f32 %v828, %v940
        %942 = vmatprep.mubr.bf16.mxu0 0
        %943 = vmatmul.mubr.bf16.gmra.mrb[0].mxu0 %v421
        %v944 = vpop.f32.mrb[0].mxu0
        %v945 = vadd.f32 %v832, %v944
        %v946 = vpop.f32.mrb[0].mxu0
        %v947 = vadd.f32 %v834, %v946
        %v948 = vpop.f32.mrb[0].mxu0
        %v949 = vadd.f32 %v836, %v948
        %v950 = vpop.f32.mrb[0].mxu0
        %v951 = vadd.f32 %v838, %v950
        %952 = vmatprep.mubr.bf16.mxu0 0
        %953 = vmatmul.mubr.bf16.gmra.mrb[0].mxu0 %v424
        %v954 = vpop.f32.mrb[0].mxu0
        %v955 = vadd.f32 %v842, %v954
        %v956 = vpop.f32.mrb[0].mxu0
        %v957 = vadd.f32 %v844, %v956
        %v958 = vpop.f32.mrb[0].mxu0
        %v959 = vadd.f32 %v846, %v958
        %v960 = vpop.f32.mrb[0].mxu0
        %v961 = vadd.f32 %v848, %v960
        %962 = vdwg.mxu0
        %v963 = vpack.c.bf16 %v889, %v885
        %v964 = vpack.c.bf16 %v899, %v895
        %v965 = vpack.c.bf16 %v909, %v905
        %v966 = vpack.c.bf16 %v919, %v915
        %v967 = vpack.c.bf16 %v929, %v925
        %v968 = vpack.c.bf16 %v939, %v935
        %v969 = vpack.c.bf16 %v949, %v945
        %v970 = vpack.c.bf16 %v959, %v955
        %v971 = vpack.c.bf16 %v891, %v887
        %v972 = vpack.c.bf16 %v901, %v897
        %v973 = vpack.c.bf16 %v911, %v907
        %v974 = vpack.c.bf16 %v921, %v917
        %v975 = vpack.c.bf16 %v931, %v927
        %v976 = vpack.c.bf16 %v941, %v937
        %v977 = vpack.c.bf16 %v951, %v947
        %v978 = vpack.c.bf16 %v961, %v957
        %s979 = smul.u32 %s25, 128
        %s980 = sshra.s32 %s979, 3
        %s981 = sand.u32 %s979, 7
        %s982 = smul.u32 %s980, 3
        %s983 = smul.addr %s982, 4
        %s984 = scalar_lea.vmem %s166, %s983 [#allocation2]
        %v985 = vld [vmem:[%s984] sm:$0xff]
        %v986 = vld [vmem:[%s984 + $0x8] sm:$0xf]
        %v987 = vld [vmem:[%s984 + $0xc] sm:$0xff]
        %v988 = vld [vmem:[%s984 + $0x14] sm:$0xf]
        %v989 = vld [vmem:[%s984 + $0x18] sm:$0xff]
        %v990 = vld [vmem:[%s984 + $0x20] sm:$0xf]
        %v991 = vld [vmem:[%s984 + $0x24] sm:$0xff]
        %v992 = vld [vmem:[%s984 + $0x2c] sm:$0xf]
        %v993 = vld [vmem:[%s984 + $0x30] sm:$0xff]
        %v994 = vld [vmem:[%s984 + $0x38] sm:$0xf]
        %v995 = vld [vmem:[%s984 + $0x3c] sm:$0xff]
        %v996 = vld [vmem:[%s984 + $0x44] sm:$0xf]
        %v997 = vld [vmem:[%s984 + $0x48] sm:$0xff]
        %v998 = vld [vmem:[%s984 + $0x50] sm:$0xf]
        %v999 = vld [vmem:[%s984 + $0x54] sm:$0xff]
        %v1000 = vld [vmem:[%s984 + $0x5c] sm:$0xf]
        %v1001 = vld [vmem:[%s984 + $0x60] sm:$0xff]
        %v1002 = vld [vmem:[%s984 + $0x68] sm:$0xf]
        %v1003 = vld [vmem:[%s984 + $0x6c] sm:$0xff]
        %v1004 = vld [vmem:[%s984 + $0x74] sm:$0xf]
        %v1005 = vld [vmem:[%s984 + $0x78] sm:$0xff]
        %v1006 = vld [vmem:[%s984 + $0x80] sm:$0xf]
        %v1007 = vld [vmem:[%s984 + $0x84] sm:$0xff]
        %v1008 = vld [vmem:[%s984 + $0x8c] sm:$0xf]
        %v1009 = vld [vmem:[%s984 + $0x90] sm:$0xff]
        %v1010 = vld [vmem:[%s984 + $0x98] sm:$0xf]
        %v1011 = vld [vmem:[%s984 + $0x9c] sm:$0xff]
        %v1012 = vld [vmem:[%s984 + $0xa4] sm:$0xf]
        %v1013 = vld [vmem:[%s984 + $0xa8] sm:$0xff]
        %v1014 = vld [vmem:[%s984 + $0xb0] sm:$0xf]
        %v1015 = vld [vmem:[%s984 + $0xb4] sm:$0xff]
        %v1016 = vld [vmem:[%s984 + $0xbc] sm:$0xf]
        %v1049 = vunpack.c.l.b16 %v985
        %v1050 = vunpack.c.h.b16 %v985
        %v1051 = vunpack.c.l.b16 %v986
        %v1052 = vunpack.c.l.b16 %v987
        %v1053 = vunpack.c.h.b16 %v987
        %v1054 = vunpack.c.l.b16 %v988
        %v1055 = vunpack.c.l.b16 %v989
        %v1056 = vunpack.c.h.b16 %v989
        %v1057 = vunpack.c.l.b16 %v990
        %v1058 = vunpack.c.l.b16 %v991
        %v1059 = vunpack.c.h.b16 %v991
        %v1060 = vunpack.c.l.b16 %v992
        %v1061 = vunpack.c.l.b16 %v993
        %v1062 = vunpack.c.h.b16 %v993
        %v1063 = vunpack.c.l.b16 %v994
        %v1064 = vunpack.c.l.b16 %v995
        %v1065 = vunpack.c.h.b16 %v995
        %v1066 = vunpack.c.l.b16 %v996
        %v1067 = vunpack.c.l.b16 %v997
        %v1068 = vunpack.c.h.b16 %v997
        %v1069 = vunpack.c.l.b16 %v998
        %v1070 = vunpack.c.l.b16 %v999
        %v1071 = vunpack.c.h.b16 %v999
        %v1072 = vunpack.c.l.b16 %v1000
        %v1073 = vunpack.c.l.b16 %v1001
        %v1074 = vunpack.c.h.b16 %v1001
        %v1075 = vunpack.c.l.b16 %v1002
        %v1076 = vunpack.c.l.b16 %v1003
        %v1077 = vunpack.c.h.b16 %v1003
        %v1078 = vunpack.c.l.b16 %v1004
        %v1079 = vunpack.c.l.b16 %v1005
        %v1080 = vunpack.c.h.b16 %v1005
        %v1081 = vunpack.c.l.b16 %v1006
        %v1082 = vunpack.c.l.b16 %v1007
        %v1083 = vunpack.c.h.b16 %v1007
        %v1084 = vunpack.c.l.b16 %v1008
        %v1085 = vunpack.c.l.b16 %v1009
        %v1086 = vunpack.c.h.b16 %v1009
        %v1087 = vunpack.c.l.b16 %v1010
        %v1088 = vunpack.c.l.b16 %v1011
        %v1089 = vunpack.c.h.b16 %v1011
        %v1090 = vunpack.c.l.b16 %v1012
        %v1091 = vunpack.c.l.b16 %v1013
        %v1092 = vunpack.c.h.b16 %v1013
        %v1093 = vunpack.c.l.b16 %v1014
        %v1094 = vunpack.c.l.b16 %v1015
        %v1095 = vunpack.c.h.b16 %v1015
        %v1096 = vunpack.c.l.b16 %v1016
        %v1097 = vpack.c.b16 %v1052, %v1049
        %v1098 = vpack.c.b16 %v1053, %v1050
        %v1099 = vpack.c.b16 %v1054, %v1051
        %v1100 = vpack.c.b16 %v1058, %v1055
        %v1101 = vpack.c.b16 %v1059, %v1056
        %v1102 = vpack.c.b16 %v1060, %v1057
        %v1103 = vpack.c.b16 %v1064, %v1061
        %v1104 = vpack.c.b16 %v1065, %v1062
        %v1105 = vpack.c.b16 %v1066, %v1063
        %v1106 = vpack.c.b16 %v1070, %v1067
        %v1107 = vpack.c.b16 %v1071, %v1068
        %v1108 = vpack.c.b16 %v1072, %v1069
        %v1109 = vpack.c.b16 %v1076, %v1073
        %v1110 = vpack.c.b16 %v1077, %v1074
        %v1111 = vpack.c.b16 %v1078, %v1075
        %v1112 = vpack.c.b16 %v1082, %v1079
        %v1113 = vpack.c.b16 %v1083, %v1080
        %v1114 = vpack.c.b16 %v1084, %v1081
        %v1115 = vpack.c.b16 %v1088, %v1085
        %v1116 = vpack.c.b16 %v1089, %v1086
        %v1117 = vpack.c.b16 %v1090, %v1087
        %v1118 = vpack.c.b16 %v1094, %v1091
        %v1119 = vpack.c.b16 %v1095, %v1092
        %v1120 = vpack.c.b16 %v1096, %v1093
        %v1145 = vunpack.c.l.b16 %v225
        %v1146 = vunpack.c.l.b16 %v227
        %v1147 = vunpack.c.l.b16 %v229
        %v1148 = vunpack.c.l.b16 %v231
        %v1149 = vunpack.c.l.b16 %v233
        %v1150 = vunpack.c.l.b16 %v235
        %v1151 = vunpack.c.l.b16 %v237
        %v1152 = vunpack.c.l.b16 %v239
        %v1153 = vunpack.c.l.b16 %v241
        %v1154 = vunpack.c.l.b16 %v243
        %v1155 = vunpack.c.l.b16 %v245
        %v1156 = vunpack.c.l.b16 %v247
        %v1157 = vunpack.c.l.b16 %v249
        %v1158 = vunpack.c.l.b16 %v251
        %v1159 = vunpack.c.l.b16 %v253
        %v1160 = vunpack.c.l.b16 %v255
        %v1161 = vunpack.c.l.b16 %v257
        %v1162 = vunpack.c.l.b16 %v259
        %v1163 = vunpack.c.l.b16 %v261
        %v1164 = vunpack.c.l.b16 %v263
        %v1165 = vunpack.c.l.b16 %v265
        %v1166 = vunpack.c.l.b16 %v267
        %v1167 = vunpack.c.l.b16 %v269
        %v1168 = vunpack.c.l.b16 %v271
        %v1169 = vunpack.c.l.b16 %v273
        %v1170 = vunpack.c.l.b16 %v275
        %v1171 = vunpack.c.l.b16 %v277
        %v1172 = vunpack.c.l.b16 %v279
        %v1173 = vunpack.c.l.b16 %v281
        %v1174 = vunpack.c.l.b16 %v283
        %v1175 = vunpack.c.l.b16 %v285
        %v1176 = vunpack.c.l.b16 %v287
        %v1177 = vunpack.c.l.b16 %v289
        %v1178 = vunpack.c.l.b16 %v291
        %v1179 = vunpack.c.l.b16 %v293
        %v1180 = vunpack.c.l.b16 %v295
        %v1181 = vunpack.c.l.b16 %v297
        %v1182 = vunpack.c.l.b16 %v299
        %v1183 = vunpack.c.l.b16 %v301
        %v1184 = vunpack.c.l.b16 %v303
        %v1185 = vunpack.c.l.b16 %v305
        %v1186 = vunpack.c.l.b16 %v307
        %v1187 = vunpack.c.l.b16 %v309
        %v1188 = vunpack.c.l.b16 %v311
        %v1189 = vunpack.c.l.b16 %v313
        %v1190 = vunpack.c.l.b16 %v315
        %v1191 = vunpack.c.l.b16 %v317
        %v1192 = vunpack.c.l.b16 %v319
        %v1193 = vpack.c.b16 %v1146, %v1145
        %v1194 = vpack.c.b16 %v1148, %v1147
        %v1195 = vpack.c.b16 %v1150, %v1149
        %v1196 = vpack.c.b16 %v1152, %v1151
        %v1197 = vpack.c.b16 %v1154, %v1153
        %v1198 = vpack.c.b16 %v1156, %v1155
        %v1199 = vpack.c.b16 %v1158, %v1157
        %v1200 = vpack.c.b16 %v1160, %v1159
        %v1201 = vpack.c.b16 %v1162, %v1161
        %v1202 = vpack.c.b16 %v1164, %v1163
        %v1203 = vpack.c.b16 %v1166, %v1165
        %v1204 = vpack.c.b16 %v1168, %v1167
        %v1205 = vpack.c.b16 %v1170, %v1169
        %v1206 = vpack.c.b16 %v1172, %v1171
        %v1207 = vpack.c.b16 %v1174, %v1173
        %v1208 = vpack.c.b16 %v1176, %v1175
        %v1209 = vpack.c.b16 %v1178, %v1177
        %v1210 = vpack.c.b16 %v1180, %v1179
        %v1211 = vpack.c.b16 %v1182, %v1181
        %v1212 = vpack.c.b16 %v1184, %v1183
        %v1213 = vpack.c.b16 %v1186, %v1185
        %v1214 = vpack.c.b16 %v1188, %v1187
        %v1215 = vpack.c.b16 %v1190, %v1189
        %v1216 = vpack.c.b16 %v1192, %v1191
        %1241 = vmatprep.subr.bf16.mxu0 0
        %1242 = vmatpush1.bf16.msra.mxu0 %v1193
        %1243 = vmatprep.subr.bf16.mxu0 0
        %1244 = vmatpush1.bf16.msra.mxu0 %v1194
        %1245 = vmatprep.subr.bf16.mxu0 0
        %1246 = vmatpush1.bf16.msra.mxu0 %v1195
        %1247 = vmatprep.subr.bf16.mxu0 0
        %1248 = vmatpush1.bf16.msra.mxu0 %v1196
        %1249 = vmatprep.subr.bf16.mxu0 0
        %1250 = vmatpush1.bf16.msra.mxu0 %v1197
        %1251 = vmatprep.subr.bf16.mxu0 0
        %1252 = vmatpush1.bf16.msra.mxu0 %v1198
        %1253 = vmatprep.subr.bf16.mxu0 0
        %1254 = vmatpush1.bf16.msra.mxu0 %v1199
        %1255 = vmatprep.subr.bf16.mxu0 0
        %1256 = vmatpush1.bf16.msra.mxu0 %v1200
        %1257 = vmatprep.subr.bf16.mxu0 0
        %1258 = vmatpush1.bf16.msra.mxu0 %v1201
        %1259 = vmatprep.subr.bf16.mxu0 0
        %1260 = vmatpush1.bf16.msra.mxu0 %v1202
        %1261 = vmatprep.subr.bf16.mxu0 0
        %1262 = vmatpush1.bf16.msra.mxu0 %v1203
        %1263 = vmatprep.subr.bf16.mxu0 0
        %1264 = vmatpush1.bf16.msra.mxu0 %v1204
        %1265 = vmatprep.subr.bf16.mxu0 0
        %1266 = vmatpush1.bf16.msra.mxu0 %v1205
        %1267 = vmatprep.subr.bf16.mxu0 0
        %1268 = vmatpush1.bf16.msra.mxu0 %v1206
        %1269 = vmatprep.subr.bf16.mxu0 0
        %1270 = vmatpush1.bf16.msra.mxu0 %v1207
        %1271 = vmatprep.subr.bf16.mxu0 0
        %1272 = vmatpush1.bf16.msra.mxu0 %v1208
        %1273 = vmatprep.mubr.bf16.mxu0 %v1098
        %1274 = vmatmul.mubr.bf16.gmra.mrb[0].mxu0 %v1097
        %v1275 = vpop.f32.mrb[0].mxu0
        %v1276 = vadd.f32 0.0, %v1275
        %v1277 = vpop.f32.mrb[0].mxu0
        %v1278 = vpop.f32.mrb[0].mxu0
        %v1279 = vadd.f32 0.0, %v1278
        %v1280 = vpop.f32.mrb[0].mxu0
        %1281 = vmatprep.mubr.bf16.mxu0 %v1101
        %1282 = vmatmul.mubr.bf16.gmra.mrb[0].mxu0 %v1100
        %v1283 = vpop.f32.mrb[0].mxu0
        %v1284 = vadd.f32 0.0, %v1283
        %v1285 = vpop.f32.mrb[0].mxu0
        %v1286 = vpop.f32.mrb[0].mxu0
        %v1287 = vadd.f32 0.0, %v1286
        %v1288 = vpop.f32.mrb[0].mxu0
        %1289 = vmatprep.mubr.bf16.mxu0 %v1104
        %1290 = vmatmul.mubr.bf16.gmra.mrb[0].mxu0 %v1103
        %v1291 = vpop.f32.mrb[0].mxu0
        %v1292 = vadd.f32 0.0, %v1291
        %v1293 = vpop.f32.mrb[0].mxu0
        %v1294 = vpop.f32.mrb[0].mxu0
        %v1295 = vadd.f32 0.0, %v1294
        %v1296 = vpop.f32.mrb[0].mxu0
        %1297 = vmatprep.mubr.bf16.mxu0 %v1107
        %1298 = vmatmul.mubr.bf16.gmra.mrb[0].mxu0 %v1106
        %v1299 = vpop.f32.mrb[0].mxu0
        %v1300 = vadd.f32 0.0, %v1299
        %v1301 = vpop.f32.mrb[0].mxu0
        %v1302 = vpop.f32.mrb[0].mxu0
        %v1303 = vadd.f32 0.0, %v1302
        %v1304 = vpop.f32.mrb[0].mxu0
        %1305 = vmatprep.mubr.bf16.mxu0 %v1110
        %1306 = vmatmul.mubr.bf16.gmra.mrb[0].mxu0 %v1109
        %v1307 = vpop.f32.mrb[0].mxu0
        %v1308 = vadd.f32 0.0, %v1307
        %v1309 = vpop.f32.mrb[0].mxu0
        %v1310 = vpop.f32.mrb[0].mxu0
        %v1311 = vadd.f32 0.0, %v1310
        %v1312 = vpop.f32.mrb[0].mxu0
        %1313 = vmatprep.mubr.bf16.mxu0 %v1113
        %1314 = vmatmul.mubr.bf16.gmra.mrb[0].mxu0 %v1112
        %v1315 = vpop.f32.mrb[0].mxu0
        %v1316 = vadd.f32 0.0, %v1315
        %v1317 = vpop.f32.mrb[0].mxu0
        %v1318 = vpop.f32.mrb[0].mxu0
        %v1319 = vadd.f32 0.0, %v1318
        %v1320 = vpop.f32.mrb[0].mxu0
        %1321 = vmatprep.mubr.bf16.mxu0 %v1116
        %1322 = vmatmul.mubr.bf16.gmra.mrb[0].mxu0 %v1115
        %v1323 = vpop.f32.mrb[0].mxu0
        %v1324 = vadd.f32 0.0, %v1323
        %v1325 = vpop.f32.mrb[0].mxu0
        %v1326 = vpop.f32.mrb[0].mxu0
        %v1327 = vadd.f32 0.0, %v1326
        %v1328 = vpop.f32.mrb[0].mxu0
        %1329 = vmatprep.mubr.bf16.mxu0 %v1119
        %1330 = vmatmul.mubr.bf16.gmra.mrb[0].mxu0 %v1118
        %v1331 = vpop.f32.mrb[0].mxu0
        %v1332 = vadd.f32 0.0, %v1331
        %v1333 = vpop.f32.mrb[0].mxu0
        %v1334 = vpop.f32.mrb[0].mxu0
        %v1335 = vadd.f32 0.0, %v1334
        %v1336 = vpop.f32.mrb[0].mxu0
        %1337 = vdwg.mxu0
        %1338 = vmatprep.subr.bf16.mxu0 0
        %1339 = vmatpush1.bf16.msra.mxu0 %v1209
        %1340 = vmatprep.subr.bf16.mxu0 0
        %1341 = vmatpush1.bf16.msra.mxu0 %v1210
        %1342 = vmatprep.subr.bf16.mxu0 0
        %1343 = vmatpush1.bf16.msra.mxu0 %v1211
        %1344 = vmatprep.subr.bf16.mxu0 0
        %1345 = vmatpush1.bf16.msra.mxu0 %v1212
        %1346 = vmatprep.subr.bf16.mxu0 0
        %1347 = vmatpush1.bf16.msra.mxu0 %v1213
        %1348 = vmatprep.subr.bf16.mxu0 0
        %1349 = vmatpush1.bf16.msra.mxu0 %v1214
        %1350 = vmatprep.subr.bf16.mxu0 0
        %1351 = vmatpush1.bf16.msra.mxu0 %v1215
        %1352 = vmatprep.subr.bf16.mxu0 0
        %1353 = vmatpush1.bf16.msra.mxu0 %v1216
        %1354 = vmatprep.subr.bf16.mxu0 0
        %1355 = vmatpush1.bf16.msra.mxu0 0
        %1356 = vmatprep.subr.bf16.mxu0 0
        %1357 = vmatpush1.bf16.msra.mxu0 0
        %1358 = vmatprep.subr.bf16.mxu0 0
        %1359 = vmatpush1.bf16.msra.mxu0 0
        %1360 = vmatprep.subr.bf16.mxu0 0
        %1361 = vmatpush1.bf16.msra.mxu0 0
        %1362 = vmatprep.subr.bf16.mxu0 0
        %1363 = vmatpush1.bf16.msra.mxu0 0
        %1364 = vmatprep.subr.bf16.mxu0 0
        %1365 = vmatpush1.bf16.msra.mxu0 0
        %1366 = vmatprep.subr.bf16.mxu0 0
        %1367 = vmatpush1.bf16.msra.mxu0 0
        %1368 = vmatprep.subr.bf16.mxu0 0
        %1369 = vmatpush1.bf16.msra.mxu0 0
        %1370 = vmatprep.mubr.bf16.mxu0 0
        %1371 = vmatmul.mubr.bf16.gmra.mrb[0].mxu0 %v1099
        %v1372 = vpop.f32.mrb[0].mxu0
        %v1373 = vadd.f32 %v1276, %v1372
        %v1374 = vpop.f32.mrb[0].mxu0
        %v1375 = vpop.f32.mrb[0].mxu0
        %v1376 = vadd.f32 %v1279, %v1375
        %v1377 = vpop.f32.mrb[0].mxu0
        %1378 = vmatprep.mubr.bf16.mxu0 0
        %1379 = vmatmul.mubr.bf16.gmra.mrb[0].mxu0 %v1102
        %v1380 = vpop.f32.mrb[0].mxu0
        %v1381 = vadd.f32 %v1284, %v1380
        %v1382 = vpop.f32.mrb[0].mxu0
        %v1383 = vpop.f32.mrb[0].mxu0
        %v1384 = vadd.f32 %v1287, %v1383
        %v1385 = vpop.f32.mrb[0].mxu0
        %1386 = vmatprep.mubr.bf16.mxu0 0
        %1387 = vmatmul.mubr.bf16.gmra.mrb[0].mxu0 %v1105
        %v1388 = vpop.f32.mrb[0].mxu0
        %v1389 = vadd.f32 %v1292, %v1388
        %v1390 = vpop.f32.mrb[0].mxu0
        %v1391 = vpop.f32.mrb[0].mxu0
        %v1392 = vadd.f32 %v1295, %v1391
        %v1393 = vpop.f32.mrb[0].mxu0
        %1394 = vmatprep.mubr.bf16.mxu0 0
        %1395 = vmatmul.mubr.bf16.gmra.mrb[0].mxu0 %v1108
        %v1396 = vpop.f32.mrb[0].mxu0
        %v1397 = vadd.f32 %v1300, %v1396
        %v1398 = vpop.f32.mrb[0].mxu0
        %v1399 = vpop.f32.mrb[0].mxu0
        %v1400 = vadd.f32 %v1303, %v1399
        %v1401 = vpop.f32.mrb[0].mxu0
        %1402 = vmatprep.mubr.bf16.mxu0 0
        %1403 = vmatmul.mubr.bf16.gmra.mrb[0].mxu0 %v1111
        %v1404 = vpop.f32.mrb[0].mxu0
        %v1405 = vadd.f32 %v1308, %v1404
        %v1406 = vpop.f32.mrb[0].mxu0
        %v1407 = vpop.f32.mrb[0].mxu0
        %v1408 = vadd.f32 %v1311, %v1407
        %v1409 = vpop.f32.mrb[0].mxu0
        %1410 = vmatprep.mubr.bf16.mxu0 0
        %1411 = vmatmul.mubr.bf16.gmra.mrb[0].mxu0 %v1114
        %v1412 = vpop.f32.mrb[0].mxu0
        %v1413 = vadd.f32 %v1316, %v1412
        %v1414 = vpop.f32.mrb[0].mxu0
        %v1415 = vpop.f32.mrb[0].mxu0
        %v1416 = vadd.f32 %v1319, %v1415
        %v1417 = vpop.f32.mrb[0].mxu0
        %1418 = vmatprep.mubr.bf16.mxu0 0
        %1419 = vmatmul.mubr.bf16.gmra.mrb[0].mxu0 %v1117
        %v1420 = vpop.f32.mrb[0].mxu0
        %v1421 = vadd.f32 %v1324, %v1420
        %v1422 = vpop.f32.mrb[0].mxu0
        %v1423 = vpop.f32.mrb[0].mxu0
        %v1424 = vadd.f32 %v1327, %v1423
        %v1425 = vpop.f32.mrb[0].mxu0
        %1426 = vmatprep.mubr.bf16.mxu0 0
        %1427 = vmatmul.mubr.bf16.gmra.mrb[0].mxu0 %v1120
        %v1428 = vpop.f32.mrb[0].mxu0
        %v1429 = vadd.f32 %v1332, %v1428
        %v1430 = vpop.f32.mrb[0].mxu0
        %v1431 = vpop.f32.mrb[0].mxu0
        %v1432 = vadd.f32 %v1335, %v1431
        %v1433 = vpop.f32.mrb[0].mxu0
        %1434 = vdwg.mxu0
        %v1435 = vpack.c.bf16 %v1376, %v1373
        %v1436 = vpack.c.bf16 %v1384, %v1381
        %v1437 = vpack.c.bf16 %v1392, %v1389
        %v1438 = vpack.c.bf16 %v1400, %v1397
        %v1439 = vpack.c.bf16 %v1408, %v1405
        %v1440 = vpack.c.bf16 %v1416, %v1413
        %v1441 = vpack.c.bf16 %v1424, %v1421
        %v1442 = vpack.c.bf16 %v1432, %v1429
        %1443 = vmatprep.subr.bf16.mxu0 0
        %1444 = vmatpush1.bf16.xpose.msra.mxu0 %v963
        %1445 = vmatprep.subr.bf16.mxu0 0
        %1446 = vmatpush1.bf16.xpose.msra.mxu0 %v964
        %1447 = vmatprep.subr.bf16.mxu0 0
        %1448 = vmatpush1.bf16.xpose.msra.mxu0 %v965
        %1449 = vmatprep.subr.bf16.mxu0 0
        %1450 = vmatpush1.bf16.xpose.msra.mxu0 %v966
        %1451 = vmatprep.subr.bf16.mxu0 0
        %1452 = vmatpush1.bf16.xpose.msra.mxu0 %v967
        %1453 = vmatprep.subr.bf16.mxu0 0
        %1454 = vmatpush1.bf16.xpose.msra.mxu0 %v968
        %1455 = vmatprep.subr.bf16.mxu0 0
        %1456 = vmatpush1.bf16.xpose.msra.mxu0 %v969
        %1457 = vmatprep.subr.bf16.mxu0 0
        %1458 = vmatpush1.bf16.xpose.msra.mxu0 %v970
        %1459 = vmatprep.subr.bf16.mxu0 0
        %1460 = vmatpush1.bf16.xpose.msra.mxu0 0
        %1461 = vmatprep.subr.bf16.mxu0 0
        %1462 = vmatpush1.bf16.xpose.msra.mxu0 0
        %1463 = vmatprep.subr.bf16.mxu0 0
        %1464 = vmatpush1.bf16.xpose.msra.mxu0 0
        %1465 = vmatprep.subr.bf16.mxu0 0
        %1466 = vmatpush1.bf16.xpose.msra.mxu0 0
        %1467 = vmatprep.subr.bf16.mxu0 0
        %1468 = vmatpush1.bf16.xpose.msra.mxu0 0
        %1469 = vmatprep.subr.bf16.mxu0 0
        %1470 = vmatpush1.bf16.xpose.msra.mxu0 0
        %1471 = vmatprep.subr.bf16.mxu0 0
        %1472 = vmatpush1.bf16.xpose.msra.mxu0 0
        %1473 = vmatprep.subr.bf16.mxu0 0
        %1474 = vmatpush1.bf16.xpose.msra.mxu0 0
        %1475 = vmatprep.mubr.bf16.mxu0 0
        %1476 = vmatmul.mubr.bf16.gmra.mrb[0].mxu0 %v1435
        %v1477 = vpop.f32.mrb[0].mxu0
        %v1478 = vadd.f32 0.0, %v1477
        %v1479 = vpop.f32.mrb[0].mxu0
        %v1480 = vpop.f32.mrb[0].mxu0
        %v1481 = vadd.f32 0.0, %v1480
        %v1482 = vpop.f32.mrb[0].mxu0
        %1483 = vmatprep.mubr.bf16.mxu0 0
        %1484 = vmatmul.mubr.bf16.gmra.mrb[0].mxu0 %v1436
        %v1485 = vpop.f32.mrb[0].mxu0
        %v1486 = vadd.f32 0.0, %v1485
        %v1487 = vpop.f32.mrb[0].mxu0
        %v1488 = vpop.f32.mrb[0].mxu0
        %v1489 = vadd.f32 0.0, %v1488
        %v1490 = vpop.f32.mrb[0].mxu0
        %1491 = vmatprep.mubr.bf16.mxu0 0
        %1492 = vmatmul.mubr.bf16.gmra.mrb[0].mxu0 %v1437
        %v1493 = vpop.f32.mrb[0].mxu0
        %v1494 = vadd.f32 0.0, %v1493
        %v1495 = vpop.f32.mrb[0].mxu0
        %v1496 = vpop.f32.mrb[0].mxu0
        %v1497 = vadd.f32 0.0, %v1496
        %v1498 = vpop.f32.mrb[0].mxu0
        %1499 = vmatprep.mubr.bf16.mxu0 0
        %1500 = vmatmul.mubr.bf16.gmra.mrb[0].mxu0 %v1438
        %v1501 = vpop.f32.mrb[0].mxu0
        %v1502 = vadd.f32 0.0, %v1501
        %v1503 = vpop.f32.mrb[0].mxu0
        %v1504 = vpop.f32.mrb[0].mxu0
        %v1505 = vadd.f32 0.0, %v1504
        %v1506 = vpop.f32.mrb[0].mxu0
        %1507 = vmatprep.mubr.bf16.mxu0 0
        %1508 = vmatmul.mubr.bf16.gmra.mrb[0].mxu0 %v1439
        %v1509 = vpop.f32.mrb[0].mxu0
        %v1510 = vadd.f32 0.0, %v1509
        %v1511 = vpop.f32.mrb[0].mxu0
        %v1512 = vpop.f32.mrb[0].mxu0
        %v1513 = vadd.f32 0.0, %v1512
        %v1514 = vpop.f32.mrb[0].mxu0
        %1515 = vmatprep.mubr.bf16.mxu0 0
        %1516 = vmatmul.mubr.bf16.gmra.mrb[0].mxu0 %v1440
        %v1517 = vpop.f32.mrb[0].mxu0
        %v1518 = vadd.f32 0.0, %v1517
        %v1519 = vpop.f32.mrb[0].mxu0
        %v1520 = vpop.f32.mrb[0].mxu0
        %v1521 = vadd.f32 0.0, %v1520
        %v1522 = vpop.f32.mrb[0].mxu0
        %1523 = vmatprep.mubr.bf16.mxu0 0
        %1524 = vmatmul.mubr.bf16.gmra.mrb[0].mxu0 %v1441
        %v1525 = vpop.f32.mrb[0].mxu0
        %v1526 = vadd.f32 0.0, %v1525
        %v1527 = vpop.f32.mrb[0].mxu0
        %v1528 = vpop.f32.mrb[0].mxu0
        %v1529 = vadd.f32 0.0, %v1528
        %v1530 = vpop.f32.mrb[0].mxu0
        %1531 = vmatprep.mubr.bf16.mxu0 0
        %1532 = vmatmul.mubr.bf16.gmra.mrb[0].mxu0 %v1442
        %v1533 = vpop.f32.mrb[0].mxu0
        %v1534 = vadd.f32 0.0, %v1533
        %v1535 = vpop.f32.mrb[0].mxu0
        %v1536 = vpop.f32.mrb[0].mxu0
        %v1537 = vadd.f32 0.0, %v1536
        %v1538 = vpop.f32.mrb[0].mxu0
        %1539 = vdwg.mxu0
        %v1540 = vlaneseq
        %v1541 = vshrl.u32 %v1540, 7
        %v1542 = vadd.s32 %v1541, 8
        %v1543 = vadd.s32 %v1541, 16
        %v1544 = vadd.s32 %v1541, 24
        %v1545 = vadd.s32 %v1541, 32
        %v1546 = vadd.s32 %v1541, 40
        %v1547 = vadd.s32 %v1541, 48
        %v1548 = vadd.s32 %v1541, 56
        %v1549 = vadd.s32 %v1541, 64
        %v1550 = vadd.s32 %v1541, 72
        %v1551 = vadd.s32 %v1541, 80
        %v1552 = vadd.s32 %v1541, 88
        %v1553 = vadd.s32 %v1541, 96
        %v1554 = vadd.s32 %v1541, 104
        %v1555 = vadd.s32 %v1541, 112
        %v1556 = vadd.s32 %v1541, 120
        %v1557 = vlaneseq
        %v1558 = vand.u32 %v1557, 127
        %v1559 = vsub.s32 %v1558, %v1541
        %v1560 = vsub.s32 %v1558, %v1542
        %v1561 = vsub.s32 %v1558, %v1543
        %v1562 = vsub.s32 %v1558, %v1544
        %v1563 = vsub.s32 %v1558, %v1545
        %v1564 = vsub.s32 %v1558, %v1546
        %v1565 = vsub.s32 %v1558, %v1547
        %v1566 = vsub.s32 %v1558, %v1548
        %v1567 = vsub.s32 %v1558, %v1549
        %v1568 = vsub.s32 %v1558, %v1550
        %v1569 = vsub.s32 %v1558, %v1551
        %v1570 = vsub.s32 %v1558, %v1552
        %v1571 = vsub.s32 %v1558, %v1553
        %v1572 = vsub.s32 %v1558, %v1554
        %v1573 = vsub.s32 %v1558, %v1555
        %v1574 = vsub.s32 %v1558, %v1556
        %v1575 = vstv %s979
        %vm1576 = vcmp.le.s32.totalorder %v1559, %v1575
        %vm1577 = vcmp.le.s32.totalorder %v1560, %v1575
        %vm1578 = vcmp.le.s32.totalorder %v1561, %v1575
        %vm1579 = vcmp.le.s32.totalorder %v1562, %v1575
        %vm1580 = vcmp.le.s32.totalorder %v1563, %v1575
        %vm1581 = vcmp.le.s32.totalorder %v1564, %v1575
        %vm1582 = vcmp.le.s32.totalorder %v1565, %v1575
        %vm1583 = vcmp.le.s32.totalorder %v1566, %v1575
        %vm1584 = vcmp.le.s32.totalorder %v1567, %v1575
        %vm1585 = vcmp.le.s32.totalorder %v1568, %v1575
        %vm1586 = vcmp.le.s32.totalorder %v1569, %v1575
        %vm1587 = vcmp.le.s32.totalorder %v1570, %v1575
        %vm1588 = vcmp.le.s32.totalorder %v1571, %v1575
        %vm1589 = vcmp.le.s32.totalorder %v1572, %v1575
        %vm1590 = vcmp.le.s32.totalorder %v1573, %v1575
        %vm1591 = vcmp.le.s32.totalorder %v1574, %v1575
        %v1592 = vsel %vm1576, %v1478, -inf
        %v1593 = vsel %vm1577, %v1481, -inf
        %v1594 = vsel %vm1578, %v1486, -inf
        %v1595 = vsel %vm1579, %v1489, -inf
        %v1596 = vsel %vm1580, %v1494, -inf
        %v1597 = vsel %vm1581, %v1497, -inf
        %v1598 = vsel %vm1582, %v1502, -inf
        %v1599 = vsel %vm1583, %v1505, -inf
        %v1600 = vsel %vm1584, %v1510, -inf
        %v1601 = vsel %vm1585, %v1513, -inf
        %v1602 = vsel %vm1586, %v1518, -inf
        %v1603 = vsel %vm1587, %v1521, -inf
        %v1604 = vsel %vm1588, %v1526, -inf
        %v1605 = vsel %vm1589, %v1529, -inf
        %v1606 = vsel %vm1590, %v1534, -inf
        %v1607 = vsel %vm1591, %v1537, -inf
        %1608 = vmax.xlane.f32.xlu0 %v1592
        %v1609 = vpop.xlane.xlu0 %1608
        %1610 = vmax.xlane.f32.xlu0 %v1593
        %v1611 = vpop.xlane.xlu0 %1610
        %1612 = vmax.xlane.f32.xlu0 %v1594
        %v1613 = vpop.xlane.xlu0 %1612
        %1614 = vmax.xlane.f32.xlu0 %v1595
        %v1615 = vpop.xlane.xlu0 %1614
        %1616 = vmax.xlane.f32.xlu0 %v1596
        %v1617 = vpop.xlane.xlu0 %1616
        %1618 = vmax.xlane.f32.xlu0 %v1597
        %v1619 = vpop.xlane.xlu0 %1618
        %1620 = vmax.xlane.f32.xlu0 %v1598
        %v1621 = vpop.xlane.xlu0 %1620
        %1622 = vmax.xlane.f32.xlu0 %v1599
        %v1623 = vpop.xlane.xlu0 %1622
        %1624 = vmax.xlane.f32.xlu0 %v1600
        %v1625 = vpop.xlane.xlu0 %1624
        %1626 = vmax.xlane.f32.xlu0 %v1601
        %v1627 = vpop.xlane.xlu0 %1626
        %1628 = vmax.xlane.f32.xlu0 %v1602
        %v1629 = vpop.xlane.xlu0 %1628
        %1630 = vmax.xlane.f32.xlu0 %v1603
        %v1631 = vpop.xlane.xlu0 %1630
        %1632 = vmax.xlane.f32.xlu0 %v1604
        %v1633 = vpop.xlane.xlu0 %1632
        %1634 = vmax.xlane.f32.xlu0 %v1605
        %v1635 = vpop.xlane.xlu0 %1634
        %1636 = vmax.xlane.f32.xlu0 %v1606
        %v1637 = vpop.xlane.xlu0 %1636
        %1638 = vmax.xlane.f32.xlu0 %v1607
        %v1639 = vpop.xlane.xlu0 %1638
        %v1640 = vsub.f32 %v1592, %v1609
        %v1641 = vsub.f32 %v1593, %v1611
        %v1642 = vsub.f32 %v1594, %v1613
        %v1643 = vsub.f32 %v1595, %v1615
        %v1644 = vsub.f32 %v1596, %v1617
        %v1645 = vsub.f32 %v1597, %v1619
        %v1646 = vsub.f32 %v1598, %v1621
        %v1647 = vsub.f32 %v1599, %v1623
        %v1648 = vsub.f32 %v1600, %v1625
        %v1649 = vsub.f32 %v1601, %v1627
        %v1650 = vsub.f32 %v1602, %v1629
        %v1651 = vsub.f32 %v1603, %v1631
        %v1652 = vsub.f32 %v1604, %v1633
        %v1653 = vsub.f32 %v1605, %v1635
        %v1654 = vsub.f32 %v1606, %v1637
        %v1655 = vsub.f32 %v1607, %v1639
        %v1656 = vmul.f32 %v1640, 1.442695
        %v1657 = vpow.pop %v1656
        %v1658 = vmul.f32 %v1641, 1.442695
        %v1659 = vpow.pop %v1658
        %v1660 = vmul.f32 %v1642, 1.442695
        %v1661 = vpow.pop %v1660
        %v1662 = vmul.f32 %v1643, 1.442695
        %v1663 = vpow.pop %v1662
        %v1664 = vmul.f32 %v1644, 1.442695
        %v1665 = vpow.pop %v1664
        %v1666 = vmul.f32 %v1645, 1.442695
        %v1667 = vpow.pop %v1666
        %v1668 = vmul.f32 %v1646, 1.442695
        %v1669 = vpow.pop %v1668
        %v1670 = vmul.f32 %v1647, 1.442695
        %v1671 = vpow.pop %v1670
        %v1672 = vmul.f32 %v1648, 1.442695
        %v1673 = vpow.pop %v1672
        %v1674 = vmul.f32 %v1649, 1.442695
        %v1675 = vpow.pop %v1674
        %v1676 = vmul.f32 %v1650, 1.442695
        %v1677 = vpow.pop %v1676
        %v1678 = vmul.f32 %v1651, 1.442695
        %v1679 = vpow.pop %v1678
        %v1680 = vmul.f32 %v1652, 1.442695
        %v1681 = vpow.pop %v1680
        %v1682 = vmul.f32 %v1653, 1.442695
        %v1683 = vpow.pop %v1682
        %v1684 = vmul.f32 %v1654, 1.442695
        %v1685 = vpow.pop %v1684
        %v1686 = vmul.f32 %v1655, 1.442695
        %v1687 = vpow.pop %v1686
        %1688 = vadd.xlane.f32.xlu0 %v1657
        %v1689 = vpop.xlane.xlu0 %1688
        %1690 = vadd.xlane.f32.xlu0 %v1659
        %v1691 = vpop.xlane.xlu0 %1690
        %1692 = vadd.xlane.f32.xlu0 %v1661
        %v1693 = vpop.xlane.xlu0 %1692
        %1694 = vadd.xlane.f32.xlu0 %v1663
        %v1695 = vpop.xlane.xlu0 %1694
        %1696 = vadd.xlane.f32.xlu0 %v1665
        %v1697 = vpop.xlane.xlu0 %1696
        %1698 = vadd.xlane.f32.xlu0 %v1667
        %v1699 = vpop.xlane.xlu0 %1698
        %1700 = vadd.xlane.f32.xlu0 %v1669
        %v1701 = vpop.xlane.xlu0 %1700
        %1702 = vadd.xlane.f32.xlu0 %v1671
        %v1703 = vpop.xlane.xlu0 %1702
        %1704 = vadd.xlane.f32.xlu0 %v1673
        %v1705 = vpop.xlane.xlu0 %1704
        %1706 = vadd.xlane.f32.xlu0 %v1675
        %v1707 = vpop.xlane.xlu0 %1706
        %1708 = vadd.xlane.f32.xlu0 %v1677
        %v1709 = vpop.xlane.xlu0 %1708
        %1710 = vadd.xlane.f32.xlu0 %v1679
        %v1711 = vpop.xlane.xlu0 %1710
        %1712 = vadd.xlane.f32.xlu0 %v1681
        %v1713 = vpop.xlane.xlu0 %1712
        %1714 = vadd.xlane.f32.xlu0 %v1683
        %v1715 = vpop.xlane.xlu0 %1714
        %1716 = vadd.xlane.f32.xlu0 %v1685
        %v1717 = vpop.xlane.xlu0 %1716
        %1718 = vadd.xlane.f32.xlu0 %v1687
        %v1719 = vpop.xlane.xlu0 %1718
        %v1720 = vrcp.pop %v1689
        %v1721 = vrcp.pop %v1691
        %v1722 = vrcp.pop %v1693
        %v1723 = vrcp.pop %v1695
        %v1724 = vrcp.pop %v1697
        %v1725 = vrcp.pop %v1699
        %v1726 = vrcp.pop %v1701
        %v1727 = vrcp.pop %v1703
        %v1728 = vrcp.pop %v1705
        %v1729 = vrcp.pop %v1707
        %v1730 = vrcp.pop %v1709
        %v1731 = vrcp.pop %v1711
        %v1732 = vrcp.pop %v1713
        %v1733 = vrcp.pop %v1715
        %v1734 = vrcp.pop %v1717
        %v1735 = vrcp.pop %v1719
        %v1736 = vmul.f32 %v1657, %v1720
        %v1737 = vmul.f32 %v1659, %v1721
        %v1738 = vmul.f32 %v1661, %v1722
        %v1739 = vmul.f32 %v1663, %v1723
        %v1740 = vmul.f32 %v1665, %v1724
        %v1741 = vmul.f32 %v1667, %v1725
        %v1742 = vmul.f32 %v1669, %v1726
        %v1743 = vmul.f32 %v1671, %v1727
        %v1744 = vmul.f32 %v1673, %v1728
        %v1745 = vmul.f32 %v1675, %v1729
        %v1746 = vmul.f32 %v1677, %v1730
        %v1747 = vmul.f32 %v1679, %v1731
        %v1748 = vmul.f32 %v1681, %v1732
        %v1749 = vmul.f32 %v1683, %v1733
        %v1750 = vmul.f32 %v1685, %v1734
        %v1751 = vmul.f32 %v1687, %v1735
        %v1752 = vpack.c.bf16 %v1737, %v1736
        %v1753 = vpack.c.bf16 %v1739, %v1738
        %v1754 = vpack.c.bf16 %v1741, %v1740
        %v1755 = vpack.c.bf16 %v1743, %v1742
        %v1756 = vpack.c.bf16 %v1745, %v1744
        %v1757 = vpack.c.bf16 %v1747, %v1746
        %v1758 = vpack.c.bf16 %v1749, %v1748
        %v1759 = vpack.c.bf16 %v1751, %v1750
        %1760 = vmatprep.subr.bf16.mxu0 0
        %1761 = vmatpush1.bf16.msra.mxu0 %v971
        %1762 = vmatprep.subr.bf16.mxu0 0
        %1763 = vmatpush1.bf16.msra.mxu0 %v972
        %1764 = vmatprep.subr.bf16.mxu0 0
        %1765 = vmatpush1.bf16.msra.mxu0 %v973
        %1766 = vmatprep.subr.bf16.mxu0 0
        %1767 = vmatpush1.bf16.msra.mxu0 %v974
        %1768 = vmatprep.subr.bf16.mxu0 0
        %1769 = vmatpush1.bf16.msra.mxu0 %v975
        %1770 = vmatprep.subr.bf16.mxu0 0
        %1771 = vmatpush1.bf16.msra.mxu0 %v976
        %1772 = vmatprep.subr.bf16.mxu0 0
        %1773 = vmatpush1.bf16.msra.mxu0 %v977
        %1774 = vmatprep.subr.bf16.mxu0 0
        %1775 = vmatpush1.bf16.msra.mxu0 %v978
        %1776 = vmatprep.subr.bf16.mxu0 0
        %1777 = vmatpush1.bf16.msra.mxu0 0
        %1778 = vmatprep.subr.bf16.mxu0 0
        %1779 = vmatpush1.bf16.msra.mxu0 0
        %1780 = vmatprep.subr.bf16.mxu0 0
        %1781 = vmatpush1.bf16.msra.mxu0 0
        %1782 = vmatprep.subr.bf16.mxu0 0
        %1783 = vmatpush1.bf16.msra.mxu0 0
        %1784 = vmatprep.subr.bf16.mxu0 0
        %1785 = vmatpush1.bf16.msra.mxu0 0
        %1786 = vmatprep.subr.bf16.mxu0 0
        %1787 = vmatpush1.bf16.msra.mxu0 0
        %1788 = vmatprep.subr.bf16.mxu0 0
        %1789 = vmatpush1.bf16.msra.mxu0 0
        %1790 = vmatprep.subr.bf16.mxu0 0
        %1791 = vmatpush1.bf16.msra.mxu0 0
        %1792 = vmatprep.mubr.bf16.mxu0 0
        %1793 = vmatmul.mubr.bf16.gmra.mrb[0].mxu0 %v1752
        %v1794 = vpop.f32.mrb[0].mxu0
        %v1795 = vadd.f32 0.0, %v1794
        %v1796 = vpop.f32.mrb[0].mxu0
        %v1797 = vpop.f32.mrb[0].mxu0
        %v1798 = vadd.f32 0.0, %v1797
        %v1799 = vpop.f32.mrb[0].mxu0
        %1800 = vmatprep.mubr.bf16.mxu0 0
        %1801 = vmatmul.mubr.bf16.gmra.mrb[0].mxu0 %v1753
        %v1802 = vpop.f32.mrb[0].mxu0
        %v1803 = vadd.f32 0.0, %v1802
        %v1804 = vpop.f32.mrb[0].mxu0
        %v1805 = vpop.f32.mrb[0].mxu0
        %v1806 = vadd.f32 0.0, %v1805
        %v1807 = vpop.f32.mrb[0].mxu0
        %1808 = vmatprep.mubr.bf16.mxu0 0
        %1809 = vmatmul.mubr.bf16.gmra.mrb[0].mxu0 %v1754
        %v1810 = vpop.f32.mrb[0].mxu0
        %v1811 = vadd.f32 0.0, %v1810
        %v1812 = vpop.f32.mrb[0].mxu0
        %v1813 = vpop.f32.mrb[0].mxu0
        %v1814 = vadd.f32 0.0, %v1813
        %v1815 = vpop.f32.mrb[0].mxu0
        %1816 = vmatprep.mubr.bf16.mxu0 0
        %1817 = vmatmul.mubr.bf16.gmra.mrb[0].mxu0 %v1755
        %v1818 = vpop.f32.mrb[0].mxu0
        %v1819 = vadd.f32 0.0, %v1818
        %v1820 = vpop.f32.mrb[0].mxu0
        %v1821 = vpop.f32.mrb[0].mxu0
        %v1822 = vadd.f32 0.0, %v1821
        %v1823 = vpop.f32.mrb[0].mxu0
        %1824 = vmatprep.mubr.bf16.mxu0 0
        %1825 = vmatmul.mubr.bf16.gmra.mrb[0].mxu0 %v1756
        %v1826 = vpop.f32.mrb[0].mxu0
        %v1827 = vadd.f32 0.0, %v1826
        %v1828 = vpop.f32.mrb[0].mxu0
        %v1829 = vpop.f32.mrb[0].mxu0
        %v1830 = vadd.f32 0.0, %v1829
        %v1831 = vpop.f32.mrb[0].mxu0
        %1832 = vmatprep.mubr.bf16.mxu0 0
        %1833 = vmatmul.mubr.bf16.gmra.mrb[0].mxu0 %v1757
        %v1834 = vpop.f32.mrb[0].mxu0
        %v1835 = vadd.f32 0.0, %v1834
        %v1836 = vpop.f32.mrb[0].mxu0
        %v1837 = vpop.f32.mrb[0].mxu0
        %v1838 = vadd.f32 0.0, %v1837
        %v1839 = vpop.f32.mrb[0].mxu0
        %1840 = vmatprep.mubr.bf16.mxu0 0
        %1841 = vmatmul.mubr.bf16.gmra.mrb[0].mxu0 %v1758
        %v1842 = vpop.f32.mrb[0].mxu0
        %v1843 = vadd.f32 0.0, %v1842
        %v1844 = vpop.f32.mrb[0].mxu0
        %v1845 = vpop.f32.mrb[0].mxu0
        %v1846 = vadd.f32 0.0, %v1845
        %v1847 = vpop.f32.mrb[0].mxu0
        %1848 = vmatprep.mubr.bf16.mxu0 0
        %1849 = vmatmul.mubr.bf16.gmra.mrb[0].mxu0 %v1759
        %v1850 = vpop.f32.mrb[0].mxu0
        %v1851 = vadd.f32 0.0, %v1850
        %v1852 = vpop.f32.mrb[0].mxu0
        %v1853 = vpop.f32.mrb[0].mxu0
        %v1854 = vadd.f32 0.0, %v1853
        %v1855 = vpop.f32.mrb[0].mxu0
        %1856 = vdwg.mxu0
        %1857 = vst [vmem:[%s190] sm:$0xff] %v1795
        %1858 = vst [vmem:[%s190 + $0x8] sm:$0xff] %v1798
        %1859 = vst [vmem:[%s190 + $0x10] sm:$0xff] %v1803
        %1860 = vst [vmem:[%s190 + $0x18] sm:$0xff] %v1806
        %1861 = vst [vmem:[%s190 + $0x20] sm:$0xff] %v1811
        %1862 = vst [vmem:[%s190 + $0x28] sm:$0xff] %v1814
        %1863 = vst [vmem:[%s190 + $0x30] sm:$0xff] %v1819
        %1864 = vst [vmem:[%s190 + $0x38] sm:$0xff] %v1822
        %1865 = vst [vmem:[%s190 + $0x40] sm:$0xff] %v1827
        %1866 = vst [vmem:[%s190 + $0x48] sm:$0xff] %v1830
        %1867 = vst [vmem:[%s190 + $0x50] sm:$0xff] %v1835
        %1868 = vst [vmem:[%s190 + $0x58] sm:$0xff] %v1838
        %1869 = vst [vmem:[%s190 + $0x60] sm:$0xff] %v1843
        %1870 = vst [vmem:[%s190 + $0x68] sm:$0xff] %v1846
        %1871 = vst [vmem:[%s190 + $0x70] sm:$0xff] %v1851
        %1872 = vst [vmem:[%s190 + $0x78] sm:$0xff] %v1854
        %s1873 = sand.u32 %s89, 1
        %s1874 = scalar_lea.sflag [#allocation4], %s1873
        %s1875 = sand.u32 %s89, 1
        %s1876 = smul.addr %s1875, 128
        %s1877 = scalar_lea.vmem [#allocation7], %s1876
        // Predicated region
        $region37: #{tpu_custom_call.1} parent=27 // pred_check
          %p1878 = pneg %p99
        $region38: #{tpu_custom_call.1} parent=27 // pred_check_branch
          %1880 = sbr.rel (%p1878) target = $region40
        $region39: #{tpu_custom_call.1} parent=27 // pred_region
          %s1881 = smul.u32 16, %s25
          %s1883 = ssub.s32 2048, 2048
          %1884 = vsyncadd %s1874, %s1883
          %s1885 = smul.addr %s24, 16
          %s1886 = sadd.s32 %s1881, %s1885
          %s1887 = smul.addr %s1886, 128
          %s1888 = scalar_lea.hbm %s2, %s1887
          %s1889 = sshll.u32 %s1877, 4
          %s1890 = int_to_ptr.vmem [resolvable:$true] %s1889
          %1895 = dma.vmem_to_hbm [thread:$0]  %s1890, 2048, %s1888, %s1874, 128, 128, 8
        $region40: #{tpu_custom_call.1} parent=27 // pred_fallthru
          _
      $region28: #{tpu_custom_call.1} parent=5 // pred_fallthru
        _
      %p1896 = scmp.le.s32.totalorder 2, %s15
      // Predicated region
      $region41: #{tpu_custom_call.1} parent=5 // pred_check
        %p1897 = pneg %p1896
      $region42: #{tpu_custom_call.1} parent=5 // pred_check_branch
        %1899 = sbr.rel (%p1897) target = $region44
      $region43: #{tpu_custom_call.1} parent=5 // pred_region
        %s1900 = ssub.s32 %s15, 2
        // Predicated region
        $region45: #{tpu_custom_call.1} parent=43 // pred_check
          %p1901 = pneg %p105
        $region46: #{tpu_custom_call.1} parent=43 // pred_check_branch
          %1903 = sbr.rel (%p1901) target = $region48
        $region47: #{tpu_custom_call.1} parent=43 // pred_region
          %s1904 = sand.u32 %s90, 1
          %s1905 = scalar_lea.sflag [#allocation4], %s1904
          %s1906 = sand.u32 %s90, 1
          %s1907 = smul.addr %s1906, 128
          %s1908 = scalar_lea.vmem [#allocation7], %s1907
          %1909 = dma.done %s1905, 2048
        $region48: #{tpu_custom_call.1} parent=43 // pred_fallthru
          _
      $region44: #{tpu_custom_call.1} parent=5 // pred_fallthru
        _
    $region6: #{tpu_custom_call.1} parent=1 // loop_footer
      %s19 = sadd.s32 1, %s15
    $region7: #{tpu_custom_call.1} parent=1 // loop_footer_branch
      %14 = sbr.rel target = $region3
    $region8: #{tpu_custom_call.1} parent=1 // loop_exit
      _
    %1910 = vsyncpa [#allocation3], 1
    %s1911 = scalar_lea.sflag [#allocation3], 1
    %1912 = vsyncpa %s1911, 1
    %1913 = vsyncpa [#allocation6], 1
    %1914 = vsyncpa [#allocation4], 1
    %s1915 = scalar_lea.sflag [#allocation4], 1
    %1916 = vsyncpa %s1915, 1

</llo_original>
